<compile_context>
chip_gen: v6e
topology: v6e:2x2x1
jax: 0.10.0
libtpu: 0.0.40
codegen_flags: <defaults>
</compile_context>

<pallas_src>
import math
import functools

import jax
import jax.numpy as jnp
from jax.experimental import pallas as pl
from jax.experimental.pallas import tpu as pltpu


def _mhsa_kernel(x_ref, wp_ref, bp_ref, wo_ref, bo_ref,
                 attn_ref, out_ref, ctx_ref, *, num_head, head_dim):
    # x_ref:    (Bt, S, D)    f32   Bt windows per grid step
    # wp_ref:   (D, 3D)       bf16  proj weight, pre-transposed (contraction-major)
    # bp_ref:   (1, 3D)       f32   proj bias
    # wo_ref:   (D, D)        bf16  output weight, pre-transposed
    # bo_ref:   (1, D)        f32   output bias
    # attn_ref: (Bt, H, S, S) f32   attention probabilities (output)
    # out_ref:  (Bt, S, D)    f32   final output (output)
    # ctx_ref:  (Bt, S, D)    f32   scratch: per-head contexts at static col offsets
    Bt, S, D = x_ref.shape
    H, hd = num_head, head_dim
    scale = 1.0 / math.sqrt(hd)

    # QKV projection on the MXU: (Bt*S, D) @ (D, 3D), bf16 operands, f32 accumulate.
    x = x_ref[...].reshape(Bt * S, D).astype(jnp.bfloat16)
    proj = jnp.dot(x, wp_ref[...], preferred_element_type=jnp.float32) + bp_ref[0]
    proj = proj.reshape(Bt, S, 3 * D)

    # Per-head attention, batched over the Bt windows. num_head is small & static,
    # so the Python loop keeps all slice offsets static (lane slices at h*hd).
    for h in range(H):
        q = (proj[:, :, h * hd:(h + 1) * hd] * scale).astype(jnp.bfloat16)       # (Bt,S,hd)
        k = proj[:, :, D + h * hd:D + (h + 1) * hd].astype(jnp.bfloat16)          # (Bt,S,hd)
        v = proj[:, :, 2 * D + h * hd:2 * D + (h + 1) * hd].astype(jnp.bfloat16)  # (Bt,S,hd)

        s = jnp.einsum('bqd,bkd->bqk', q, k,
                       preferred_element_type=jnp.float32)                        # (Bt,S,S)
        s_max = jnp.max(s, axis=-1, keepdims=True)
        e = jnp.exp(s - s_max)
        denom = jnp.sum(e, axis=-1, keepdims=True)
        p = e * pl.reciprocal(denom, approx=True)                                 # softmax, f32

        attn_ref[:, h, :, :] = p
        ctx_ref[:, :, h * hd:(h + 1) * hd] = jnp.einsum(
            'bqk,bkd->bqd', p.astype(jnp.bfloat16), v,
            preferred_element_type=jnp.float32)

    # Final linear: (Bt*S, D) @ (D, D) + b, bf16 on MXU, f32 accumulation.
    ctx = ctx_ref[...].reshape(Bt * S, D).astype(jnp.bfloat16)
    out = jnp.dot(ctx, wo_ref[...], preferred_element_type=jnp.float32) + bo_ref[0]
    out_ref[...] = out.reshape(Bt, S, D).astype(out_ref.dtype)


def _pick_block_bs(bs, S, D, H, budget_bytes=16 * 1024 * 1024):
    """Largest divisor of bs whose per-step VMEM footprint fits the budget."""
    # Constant-index weight blocks still get double-buffered allocations.
    weight_bytes = (D * 3 * D + D * D) * 2 * 2 + (4 * D) * 4 * 2
    for bt in range(bs, 0, -1):
        if bs % bt:
            continue
        io_bytes = (2 * bt * S * D * 4) * 2        # x + out blocks (double-buffered)
        attn_bytes = bt * H * S * S * 4 * 2        # attn block (double-buffered)
        scratch_bytes = bt * S * D * 4             # ctx scratch
        work_bytes = bt * S * (3 * D) * 4 * 3 + bt * S * S * 4 * 4   # rough temporaries
        total = weight_bytes + io_bytes + attn_bytes + scratch_bytes + work_bytes
        if total <= budget_bytes:
            return bt
    return 1


def multi_head_self_attention(x, wp, bp, wo, bo, num_head, *, block_bs=None):
    """Pallas implementation of MultiHeadSelfAttention.forward (additive_mask=None).

    Returns (attn_prob, output) with attn_prob shape (bs*num_head, S, S) and
    output shape (bs, S, D), matching the PyTorch module.
    """
    # TODO(synk): additive_mask path not implemented (None path only).
    bs, S, D = x.shape
    assert D % num_head == 0
    hd = D // num_head

    # Pre-transpose weights once (contraction-major) + cast to bf16 for the MXU.
    wp_t = jnp.asarray(wp.T, dtype=jnp.bfloat16)   # (D, 3D)
    wo_t = jnp.asarray(wo.T, dtype=jnp.bfloat16)   # (D, D)
    bp2 = bp.reshape(1, -1).astype(jnp.float32)    # (1, 3D)
    bo2 = bo.reshape(1, -1).astype(jnp.float32)    # (1, D)

    if block_bs is None:
        # For very small bs on multi-core chips (v7x) one may prefer block_bs=1 to
        # expose >1 parallel grid step; default favors fewer, bigger steps.
        block_bs = _pick_block_bs(bs, S, D, num_head)
    assert bs % block_bs == 0
    Bt = block_bs

    kernel = functools.partial(_mhsa_kernel, num_head=num_head, head_dim=hd)

    attn, out = pl.pallas_call(
        kernel,
        out_shape=(
            jax.ShapeDtypeStruct((bs, num_head, S, S), jnp.float32),
            jax.ShapeDtypeStruct((bs, S, D), x.dtype),
        ),
        grid_spec=pltpu.PrefetchScalarGridSpec(
            num_scalar_prefetch=0,
            grid=(bs // Bt,),
            in_specs=[
                pl.BlockSpec((Bt, S, D), lambda b: (b, 0, 0)),       # x
                pl.BlockSpec((D, 3 * D), lambda b: (0, 0)),          # wp^T (bf16)
                pl.BlockSpec((1, 3 * D), lambda b: (0, 0)),          # bp
                pl.BlockSpec((D, D), lambda b: (0, 0)),              # wo^T (bf16)
                pl.BlockSpec((1, D), lambda b: (0, 0)),              # bo
            ],
            out_specs=[
                pl.BlockSpec((Bt, num_head, S, S), lambda b: (b, 0, 0, 0)),
                pl.BlockSpec((Bt, S, D), lambda b: (b, 0, 0)),
            ],
            scratch_shapes=[pltpu.VMEM((Bt, S, D), jnp.float32)],    # ctx slab
        ),
        compiler_params=pltpu.CompilerParams(
            dimension_semantics=("parallel",),
            vmem_limit_bytes=48 * 1024 * 1024,   # < 64 MiB physical on v7x
        ),
    )(x, wp_t, bp2, wo_t, bo2)

    # Match PyTorch: attn_prob has shape (bs*num_head, S, S).
    attn_prob = attn.reshape(bs * num_head, S, S)
    return attn_prob, out


def _reference(x, wp, bp, wo, bo, num_head):
    """Plain-JAX f32 reference matching the PyTorch forward."""
    bs, S, D = x.shape
    hd = D // num_head
    proj = x @ wp.T + bp                              # (bs, S, 3D)
    proj = proj.reshape(bs, S, 3 * num_head, hd).transpose(0, 2, 1, 3)
    q, k, v = jnp.split(proj, 3, axis=1)
    q = q.reshape(bs * num_head, S, hd)
    k = k.reshape(bs * num_head, S, hd)
    v = v.reshape(bs * num_head, S, hd)
    scores = jnp.einsum("bqd,bkd->bqk", q, k) / math.sqrt(hd)
    attn = jax.nn.softmax(scores, axis=-1)
    out = jnp.einsum("bqk,bkd->bqd", attn, v)
    out = out.reshape(bs, num_head, S, hd).transpose(0, 2, 1, 3).reshape(bs, S, D)
    out = out @ wo.T + bo
    return attn, out


if __name__ == "__main__":
    bs, seqlen, model_dim, num_head = 2, 8, 32, 4

    key = jax.random.PRNGKey(0)
    kx, kwp, kbp, kwo, kbo = jax.random.split(key, 5)

    # deterministic param init (PyTorch nn.Linear-style uniform bounds)
    bound_p = 1.0 / math.sqrt(model_dim)
    wp = jax.random.uniform(kwp, (3 * model_dim, model_dim), jnp.float32,
                            -bound_p, bound_p)
    bp = jax.random.uniform(kbp, (3 * model_dim,), jnp.float32, -bound_p, bound_p)
    wo = jax.random.uniform(kwo, (model_dim, model_dim), jnp.float32,
                            -bound_p, bound_p)
    bo = jax.random.uniform(kbo, (model_dim,), jnp.float32, -bound_p, bound_p)

    x = jax.random.normal(kx, (bs, seqlen, model_dim), jnp.float32)

    attn_prob, output = multi_head_self_attention(x, wp, bp, wo, bo, num_head)
    attn_prob, output = jax.block_until_ready((attn_prob, output))

    attn_ref, out_ref = _reference(x, wp, bp, wo, bo, num_head)
    assert attn_prob.shape == (bs * num_head, seqlen, seqlen)
    assert output.shape == (bs, seqlen, model_dim)
    # bf16 MXU matmuls + approximate reciprocal -> relaxed tolerances vs f32 ref.
    assert jnp.allclose(attn_prob, attn_ref, atol=5e-2, rtol=5e-2)
    assert jnp.allclose(output, out_ref, atol=1e-1, rtol=5e-2)
    # softmax rows still (approximately) sum to one
    assert jnp.allclose(attn_prob.sum(-1), 1.0, atol=2e-2)

    print("KERNEL_OK")
</pallas_src>

<mosaic_0001>
module attributes {stable_mosaic.version = 11 : i64} {
  func.func @_mhsa_kernel(%arg0: i32, %arg1: memref<2x8x32xf32, #tpu.memory_space<vmem>>, %arg2: memref<32x96xbf16, #tpu.memory_space<vmem>>, %arg3: memref<1x96xf32, #tpu.memory_space<vmem>>, %arg4: memref<32x32xbf16, #tpu.memory_space<vmem>>, %arg5: memref<1x32xf32, #tpu.memory_space<vmem>>, %arg6: memref<2x4x8x8xf32, #tpu.memory_space<vmem>>, %arg7: memref<2x8x32xf32, #tpu.memory_space<vmem>>, %arg8: memref<2x8x32xf32, #tpu.memory_space<vmem>>) attributes {dimension_semantics = [#tpu.dimension_semantics<parallel>], iteration_bounds = array<i64: 1>, scalar_prefetch = 0 : i64, scratch_operands = 1 : i64, tpu.core_type = #tpu.core_type<tc>, window_params = [{transform_indices = @transform_0, window_bounds = array<i64: 2, 8, 32>}, {pipeline_mode = #tpu.pipeline_mode<synchronous>, transform_indices = @transform_1, window_bounds = array<i64: 32, 96>}, {pipeline_mode = #tpu.pipeline_mode<synchronous>, transform_indices = @transform_2, window_bounds = array<i64: 1, 96>}, {pipeline_mode = #tpu.pipeline_mode<synchronous>, transform_indices = @transform_3, window_bounds = array<i64: 32, 32>}, {pipeline_mode = #tpu.pipeline_mode<synchronous>, transform_indices = @transform_4, window_bounds = array<i64: 1, 32>}, {transform_indices = @transform_5, window_bounds = array<i64: 2, 4, 8, 8>}, {transform_indices = @transform_6, window_bounds = array<i64: 2, 8, 32>}]} {
    %c0 = arith.constant 0 : index
    %c0_0 = arith.constant 0 : index
    %c0_1 = arith.constant 0 : index
    %0 = vector.load %arg1[%c0, %c0_0, %c0_1] : memref<2x8x32xf32, #tpu.memory_space<vmem>>, vector<2x8x32xf32>
    %1 = vector.shape_cast %0 : vector<2x8x32xf32> to vector<16x32xf32>
    %2 = arith.truncf %1 : vector<16x32xf32> to vector<16x32xbf16>
    %c0_2 = arith.constant 0 : index
    %c0_3 = arith.constant 0 : index
    %3 = vector.load %arg2[%c0_2, %c0_3] : memref<32x96xbf16, #tpu.memory_space<vmem>>, vector<32x96xbf16>
    %cst = arith.constant dense<0.000000e+00> : vector<16x96xf32>
    %4 = tpu.matmul %2, %3, %cst {dimension_numbers = #tpu.dot_dimension_numbers<[1], [0], [0], [1], [0, 0, 1, 1], [], []>} : vector<16x32xbf16>, vector<32x96xbf16>, vector<16x96xf32> -> vector<16x96xf32>
    %c0_4 = arith.constant 0 : index
    %c0_5 = arith.constant 0 : index
    %5 = vector.load %arg3[%c0_4, %c0_5] : memref<1x96xf32, #tpu.memory_space<vmem>>, vector<1x96xf32>
    %6 = vector.shape_cast %5 : vector<1x96xf32> to vector<96xf32>
    %7 = vector.shape_cast %6 : vector<96xf32> to vector<1x96xf32>
    %8 = vector.broadcast %7 : vector<1x96xf32> to vector<16x96xf32>
    %9 = arith.addf %4, %8 : vector<16x96xf32>
    %10 = vector.shape_cast %9 : vector<16x96xf32> to vector<2x8x96xf32>
    %11 = vector.extract_strided_slice %10 {offsets = [0, 0, 0], sizes = [2, 8, 8], strides = [1, 1, 1]} : vector<2x8x96xf32> to vector<2x8x8xf32>
    %cst_6 = arith.constant 0.353553385 : f32
    %12 = vector.broadcast %cst_6 : f32 to vector<2x8x8xf32>
    %13 = arith.mulf %11, %12 : vector<2x8x8xf32>
    %14 = arith.truncf %13 : vector<2x8x8xf32> to vector<2x8x8xbf16>
    %15 = vector.extract_strided_slice %10 {offsets = [0, 0, 32], sizes = [2, 8, 8], strides = [1, 1, 1]} : vector<2x8x96xf32> to vector<2x8x8xf32>
    %16 = arith.truncf %15 : vector<2x8x8xf32> to vector<2x8x8xbf16>
    %17 = vector.extract_strided_slice %10 {offsets = [0, 0, 64], sizes = [2, 8, 8], strides = [1, 1, 1]} : vector<2x8x96xf32> to vector<2x8x8xf32>
    %18 = arith.truncf %17 : vector<2x8x8xf32> to vector<2x8x8xbf16>
    "tpu.trace_start"() <{level = 10 : i32, message = "bqd,bkd->bqk"}> : () -> ()
    %cst_7 = arith.constant dense<0.000000e+00> : vector<2x8x8xf32>
    %19 = tpu.matmul %14, %16, %cst_7 {dimension_numbers = #tpu.dot_dimension_numbers<[2], [2], [1], [1], [0, 0, 0, 1, 1, 1], [0], [0]>} : vector<2x8x8xbf16>, vector<2x8x8xbf16>, vector<2x8x8xf32> -> vector<2x8x8xf32>
    "tpu.trace_stop"() : () -> ()
    %cst_8 = arith.constant dense<0xFF800000> : vector<2x8xf32>
    %20 = vector.multi_reduction <maximumf>, %19, %cst_8 [2] : vector<2x8x8xf32> to vector<2x8xf32>
    %21 = vector.shape_cast %20 : vector<2x8xf32> to vector<2x8x1xf32>
    %22 = vector.broadcast %21 : vector<2x8x1xf32> to vector<2x8x8xf32>
    %23 = arith.subf %19, %22 : vector<2x8x8xf32>
    %24 = math.exp %23 : vector<2x8x8xf32>
    %cst_9 = arith.constant dense<0.000000e+00> : vector<2x8xf32>
    %25 = vector.multi_reduction <add>, %24, %cst_9 [2] : vector<2x8x8xf32> to vector<2x8xf32>
    %26 = vector.shape_cast %25 : vector<2x8xf32> to vector<2x8x1xf32>
    %27 = tpu.reciprocal %26 {approx = true} : vector<2x8x1xf32> -> vector<2x8x1xf32>
    %28 = vector.broadcast %27 : vector<2x8x1xf32> to vector<2x8x8xf32>
    %29 = arith.mulf %24, %28 : vector<2x8x8xf32>
    %c0_10 = arith.constant 0 : index
    %c0_11 = arith.constant 0 : index
    %c0_12 = arith.constant 0 : index
    %c0_13 = arith.constant 0 : index
    %30 = vector.load %arg6[%c0_10, %c0_11, %c0_12, %c0_13] : memref<2x4x8x8xf32, #tpu.memory_space<vmem>>, vector<2x1x8x8xf32>
    %31 = vector.shape_cast %30 : vector<2x1x8x8xf32> to vector<2x8x8xf32>
    %32 = vector.shape_cast %29 : vector<2x8x8xf32> to vector<2x1x8x8xf32>
    tpu.vector_store %arg6[%c0_10, %c0_11, %c0_12, %c0_13], %32 {strides = array<i32>} : memref<2x4x8x8xf32, #tpu.memory_space<vmem>>, vector<2x1x8x8xf32>,
    %33 = arith.truncf %29 : vector<2x8x8xf32> to vector<2x8x8xbf16>
    "tpu.trace_start"() <{level = 10 : i32, message = "bqk,bkd->bqd"}> : () -> ()
    %cst_14 = arith.constant dense<0.000000e+00> : vector<2x8x8xf32>
    %34 = tpu.matmul %33, %18, %cst_14 {dimension_numbers = #tpu.dot_dimension_numbers<[2], [1], [1], [2], [0, 0, 0, 1, 1, 2], [0], [0]>} : vector<2x8x8xbf16>, vector<2x8x8xbf16>, vector<2x8x8xf32> -> vector<2x8x8xf32>
    "tpu.trace_stop"() : () -> ()
    %c0_15 = arith.constant 0 : index
    %c0_16 = arith.constant 0 : index
    %c0_17 = arith.constant 0 : index
    %35 = vector.load %arg8[%c0_15, %c0_16, %c0_17] : memref<2x8x32xf32, #tpu.memory_space<vmem>>, vector<2x8x8xf32>
    tpu.vector_store %arg8[%c0_15, %c0_16, %c0_17], %34 {strides = array<i32>} : memref<2x8x32xf32, #tpu.memory_space<vmem>>, vector<2x8x8xf32>,
    %36 = vector.extract_strided_slice %10 {offsets = [0, 0, 8], sizes = [2, 8, 8], strides = [1, 1, 1]} : vector<2x8x96xf32> to vector<2x8x8xf32>
    %cst_18 = arith.constant 0.353553385 : f32
    %37 = vector.broadcast %cst_18 : f32 to vector<2x8x8xf32>
    %38 = arith.mulf %36, %37 : vector<2x8x8xf32>
    %39 = arith.truncf %38 : vector<2x8x8xf32> to vector<2x8x8xbf16>
    %40 = vector.extract_strided_slice %10 {offsets = [0, 0, 40], sizes = [2, 8, 8], strides = [1, 1, 1]} : vector<2x8x96xf32> to vector<2x8x8xf32>
    %41 = arith.truncf %40 : vector<2x8x8xf32> to vector<2x8x8xbf16>
    %42 = vector.extract_strided_slice %10 {offsets = [0, 0, 72], sizes = [2, 8, 8], strides = [1, 1, 1]} : vector<2x8x96xf32> to vector<2x8x8xf32>
    %43 = arith.truncf %42 : vector<2x8x8xf32> to vector<2x8x8xbf16>
    "tpu.trace_start"() <{level = 10 : i32, message = "bqd,bkd->bqk"}> : () -> ()
    %cst_19 = arith.constant dense<0.000000e+00> : vector<2x8x8xf32>
    %44 = tpu.matmul %39, %41, %cst_19 {dimension_numbers = #tpu.dot_dimension_numbers<[2], [2], [1], [1], [0, 0, 0, 1, 1, 1], [0], [0]>} : vector<2x8x8xbf16>, vector<2x8x8xbf16>, vector<2x8x8xf32> -> vector<2x8x8xf32>
    "tpu.trace_stop"() : () -> ()
    %cst_20 = arith.constant dense<0xFF800000> : vector<2x8xf32>
    %45 = vector.multi_reduction <maximumf>, %44, %cst_20 [2] : vector<2x8x8xf32> to vector<2x8xf32>
    %46 = vector.shape_cast %45 : vector<2x8xf32> to vector<2x8x1xf32>
    %47 = vector.broadcast %46 : vector<2x8x1xf32> to vector<2x8x8xf32>
    %48 = arith.subf %44, %47 : vector<2x8x8xf32>
    %49 = math.exp %48 : vector<2x8x8xf32>
    %cst_21 = arith.constant dense<0.000000e+00> : vector<2x8xf32>
    %50 = vector.multi_reduction <add>, %49, %cst_21 [2] : vector<2x8x8xf32> to vector<2x8xf32>
    %51 = vector.shape_cast %50 : vector<2x8xf32> to vector<2x8x1xf32>
    %52 = tpu.reciprocal %51 {approx = true} : vector<2x8x1xf32> -> vector<2x8x1xf32>
    %53 = vector.broadcast %52 : vector<2x8x1xf32> to vector<2x8x8xf32>
    %54 = arith.mulf %49, %53 : vector<2x8x8xf32>
    %c0_22 = arith.constant 0 : index
    %c1 = arith.constant 1 : index
    %c0_23 = arith.constant 0 : index
    %c0_24 = arith.constant 0 : index
    %55 = vector.load %arg6[%c0_22, %c1, %c0_23, %c0_24] : memref<2x4x8x8xf32, #tpu.memory_space<vmem>>, vector<2x1x8x8xf32>
    %56 = vector.shape_cast %55 : vector<2x1x8x8xf32> to vector<2x8x8xf32>
    %57 = vector.shape_cast %54 : vector<2x8x8xf32> to vector<2x1x8x8xf32>
    tpu.vector_store %arg6[%c0_22, %c1, %c0_23, %c0_24], %57 {strides = array<i32>} : memref<2x4x8x8xf32, #tpu.memory_space<vmem>>, vector<2x1x8x8xf32>,
    %58 = arith.truncf %54 : vector<2x8x8xf32> to vector<2x8x8xbf16>
    "tpu.trace_start"() <{level = 10 : i32, message = "bqk,bkd->bqd"}> : () -> ()
    %cst_25 = arith.constant dense<0.000000e+00> : vector<2x8x8xf32>
    %59 = tpu.matmul %58, %43, %cst_25 {dimension_numbers = #tpu.dot_dimension_numbers<[2], [1], [1], [2], [0, 0, 0, 1, 1, 2], [0], [0]>} : vector<2x8x8xbf16>, vector<2x8x8xbf16>, vector<2x8x8xf32> -> vector<2x8x8xf32>
    "tpu.trace_stop"() : () -> ()
    %c0_26 = arith.constant 0 : index
    %c0_27 = arith.constant 0 : index
    %c8 = arith.constant 8 : index
    %60 = vector.load %arg8[%c0_26, %c0_27, %c8] : memref<2x8x32xf32, #tpu.memory_space<vmem>>, vector<2x8x8xf32>
    tpu.vector_store %arg8[%c0_26, %c0_27, %c8], %59 {strides = array<i32>} : memref<2x8x32xf32, #tpu.memory_space<vmem>>, vector<2x8x8xf32>,
    %61 = vector.extract_strided_slice %10 {offsets = [0, 0, 16], sizes = [2, 8, 8], strides = [1, 1, 1]} : vector<2x8x96xf32> to vector<2x8x8xf32>
    %cst_28 = arith.constant 0.353553385 : f32
    %62 = vector.broadcast %cst_28 : f32 to vector<2x8x8xf32>
    %63 = arith.mulf %61, %62 : vector<2x8x8xf32>
    %64 = arith.truncf %63 : vector<2x8x8xf32> to vector<2x8x8xbf16>
    %65 = vector.extract_strided_slice %10 {offsets = [0, 0, 48], sizes = [2, 8, 8], strides = [1, 1, 1]} : vector<2x8x96xf32> to vector<2x8x8xf32>
    %66 = arith.truncf %65 : vector<2x8x8xf32> to vector<2x8x8xbf16>
    %67 = vector.extract_strided_slice %10 {offsets = [0, 0, 80], sizes = [2, 8, 8], strides = [1, 1, 1]} : vector<2x8x96xf32> to vector<2x8x8xf32>
    %68 = arith.truncf %67 : vector<2x8x8xf32> to vector<2x8x8xbf16>
    "tpu.trace_start"() <{level = 10 : i32, message = "bqd,bkd->bqk"}> : () -> ()
    %cst_29 = arith.constant dense<0.000000e+00> : vector<2x8x8xf32>
    %69 = tpu.matmul %64, %66, %cst_29 {dimension_numbers = #tpu.dot_dimension_numbers<[2], [2], [1], [1], [0, 0, 0, 1, 1, 1], [0], [0]>} : vector<2x8x8xbf16>, vector<2x8x8xbf16>, vector<2x8x8xf32> -> vector<2x8x8xf32>
    "tpu.trace_stop"() : () -> ()
    %cst_30 = arith.constant dense<0xFF800000> : vector<2x8xf32>
    %70 = vector.multi_reduction <maximumf>, %69, %cst_30 [2] : vector<2x8x8xf32> to vector<2x8xf32>
    %71 = vector.shape_cast %70 : vector<2x8xf32> to vector<2x8x1xf32>
    %72 = vector.broadcast %71 : vector<2x8x1xf32> to vector<2x8x8xf32>
    %73 = arith.subf %69, %72 : vector<2x8x8xf32>
    %74 = math.exp %73 : vector<2x8x8xf32>
    %cst_31 = arith.constant dense<0.000000e+00> : vector<2x8xf32>
    %75 = vector.multi_reduction <add>, %74, %cst_31 [2] : vector<2x8x8xf32> to vector<2x8xf32>
    %76 = vector.shape_cast %75 : vector<2x8xf32> to vector<2x8x1xf32>
    %77 = tpu.reciprocal %76 {approx = true} : vector<2x8x1xf32> -> vector<2x8x1xf32>
    %78 = vector.broadcast %77 : vector<2x8x1xf32> to vector<2x8x8xf32>
    %79 = arith.mulf %74, %78 : vector<2x8x8xf32>
    %c0_32 = arith.constant 0 : index
    %c2 = arith.constant 2 : index
    %c0_33 = arith.constant 0 : index
    %c0_34 = arith.constant 0 : index
    %80 = vector.load %arg6[%c0_32, %c2, %c0_33, %c0_34] : memref<2x4x8x8xf32, #tpu.memory_space<vmem>>, vector<2x1x8x8xf32>
    %81 = vector.shape_cast %80 : vector<2x1x8x8xf32> to vector<2x8x8xf32>
    %82 = vector.shape_cast %79 : vector<2x8x8xf32> to vector<2x1x8x8xf32>
    tpu.vector_store %arg6[%c0_32, %c2, %c0_33, %c0_34], %82 {strides = array<i32>} : memref<2x4x8x8xf32, #tpu.memory_space<vmem>>, vector<2x1x8x8xf32>,
    %83 = arith.truncf %79 : vector<2x8x8xf32> to vector<2x8x8xbf16>
    "tpu.trace_start"() <{level = 10 : i32, message = "bqk,bkd->bqd"}> : () -> ()
    %cst_35 = arith.constant dense<0.000000e+00> : vector<2x8x8xf32>
    %84 = tpu.matmul %83, %68, %cst_35 {dimension_numbers = #tpu.dot_dimension_numbers<[2], [1], [1], [2], [0, 0, 0, 1, 1, 2], [0], [0]>} : vector<2x8x8xbf16>, vector<2x8x8xbf16>, vector<2x8x8xf32> -> vector<2x8x8xf32>
    "tpu.trace_stop"() : () -> ()
    %c0_36 = arith.constant 0 : index
    %c0_37 = arith.constant 0 : index
    %c16 = arith.constant 16 : index
    %85 = vector.load %arg8[%c0_36, %c0_37, %c16] : memref<2x8x32xf32, #tpu.memory_space<vmem>>, vector<2x8x8xf32>
    tpu.vector_store %arg8[%c0_36, %c0_37, %c16], %84 {strides = array<i32>} : memref<2x8x32xf32, #tpu.memory_space<vmem>>, vector<2x8x8xf32>,
    %86 = vector.extract_strided_slice %10 {offsets = [0, 0, 24], sizes = [2, 8, 8], strides = [1, 1, 1]} : vector<2x8x96xf32> to vector<2x8x8xf32>
    %cst_38 = arith.constant 0.353553385 : f32
    %87 = vector.broadcast %cst_38 : f32 to vector<2x8x8xf32>
    %88 = arith.mulf %86, %87 : vector<2x8x8xf32>
    %89 = arith.truncf %88 : vector<2x8x8xf32> to vector<2x8x8xbf16>
    %90 = vector.extract_strided_slice %10 {offsets = [0, 0, 56], sizes = [2, 8, 8], strides = [1, 1, 1]} : vector<2x8x96xf32> to vector<2x8x8xf32>
    %91 = arith.truncf %90 : vector<2x8x8xf32> to vector<2x8x8xbf16>
    %92 = vector.extract_strided_slice %10 {offsets = [0, 0, 88], sizes = [2, 8, 8], strides = [1, 1, 1]} : vector<2x8x96xf32> to vector<2x8x8xf32>
    %93 = arith.truncf %92 : vector<2x8x8xf32> to vector<2x8x8xbf16>
    "tpu.trace_start"() <{level = 10 : i32, message = "bqd,bkd->bqk"}> : () -> ()
    %cst_39 = arith.constant dense<0.000000e+00> : vector<2x8x8xf32>
    %94 = tpu.matmul %89, %91, %cst_39 {dimension_numbers = #tpu.dot_dimension_numbers<[2], [2], [1], [1], [0, 0, 0, 1, 1, 1], [0], [0]>} : vector<2x8x8xbf16>, vector<2x8x8xbf16>, vector<2x8x8xf32> -> vector<2x8x8xf32>
    "tpu.trace_stop"() : () -> ()
    %cst_40 = arith.constant dense<0xFF800000> : vector<2x8xf32>
    %95 = vector.multi_reduction <maximumf>, %94, %cst_40 [2] : vector<2x8x8xf32> to vector<2x8xf32>
    %96 = vector.shape_cast %95 : vector<2x8xf32> to vector<2x8x1xf32>
    %97 = vector.broadcast %96 : vector<2x8x1xf32> to vector<2x8x8xf32>
    %98 = arith.subf %94, %97 : vector<2x8x8xf32>
    %99 = math.exp %98 : vector<2x8x8xf32>
    %cst_41 = arith.constant dense<0.000000e+00> : vector<2x8xf32>
    %100 = vector.multi_reduction <add>, %99, %cst_41 [2] : vector<2x8x8xf32> to vector<2x8xf32>
    %101 = vector.shape_cast %100 : vector<2x8xf32> to vector<2x8x1xf32>
    %102 = tpu.reciprocal %101 {approx = true} : vector<2x8x1xf32> -> vector<2x8x1xf32>
    %103 = vector.broadcast %102 : vector<2x8x1xf32> to vector<2x8x8xf32>
    %104 = arith.mulf %99, %103 : vector<2x8x8xf32>
    %c0_42 = arith.constant 0 : index
    %c3 = arith.constant 3 : index
    %c0_43 = arith.constant 0 : index
    %c0_44 = arith.constant 0 : index
    %105 = vector.load %arg6[%c0_42, %c3, %c0_43, %c0_44] : memref<2x4x8x8xf32, #tpu.memory_space<vmem>>, vector<2x1x8x8xf32>
    %106 = vector.shape_cast %105 : vector<2x1x8x8xf32> to vector<2x8x8xf32>
    %107 = vector.shape_cast %104 : vector<2x8x8xf32> to vector<2x1x8x8xf32>
    tpu.vector_store %arg6[%c0_42, %c3, %c0_43, %c0_44], %107 {strides = array<i32>} : memref<2x4x8x8xf32, #tpu.memory_space<vmem>>, vector<2x1x8x8xf32>,
    %108 = arith.truncf %104 : vector<2x8x8xf32> to vector<2x8x8xbf16>
    "tpu.trace_start"() <{level = 10 : i32, message = "bqk,bkd->bqd"}> : () -> ()
    %cst_45 = arith.constant dense<0.000000e+00> : vector<2x8x8xf32>
    %109 = tpu.matmul %108, %93, %cst_45 {dimension_numbers = #tpu.dot_dimension_numbers<[2], [1], [1], [2], [0, 0, 0, 1, 1, 2], [0], [0]>} : vector<2x8x8xbf16>, vector<2x8x8xbf16>, vector<2x8x8xf32> -> vector<2x8x8xf32>
    "tpu.trace_stop"() : () -> ()
    %c0_46 = arith.constant 0 : index
    %c0_47 = arith.constant 0 : index
    %c24 = arith.constant 24 : index
    %110 = vector.load %arg8[%c0_46, %c0_47, %c24] : memref<2x8x32xf32, #tpu.memory_space<vmem>>, vector<2x8x8xf32>
    tpu.vector_store %arg8[%c0_46, %c0_47, %c24], %109 {strides = array<i32>} : memref<2x8x32xf32, #tpu.memory_space<vmem>>, vector<2x8x8xf32>,
    %c0_48 = arith.constant 0 : index
    %c0_49 = arith.constant 0 : index
    %c0_50 = arith.constant 0 : index
    %111 = vector.load %arg8[%c0_48, %c0_49, %c0_50] : memref<2x8x32xf32, #tpu.memory_space<vmem>>, vector<2x8x32xf32>
    %112 = vector.shape_cast %111 : vector<2x8x32xf32> to vector<16x32xf32>
    %113 = arith.truncf %112 : vector<16x32xf32> to vector<16x32xbf16>
    %c0_51 = arith.constant 0 : index
    %c0_52 = arith.constant 0 : index
    %114 = vector.load %arg4[%c0_51, %c0_52] : memref<32x32xbf16, #tpu.memory_space<vmem>>, vector<32x32xbf16>
    %cst_53 = arith.constant dense<0.000000e+00> : vector<16x32xf32>
    %115 = tpu.matmul %113, %114, %cst_53 {dimension_numbers = #tpu.dot_dimension_numbers<[1], [0], [0], [1], [0, 0, 1, 1], [], []>} : vector<16x32xbf16>, vector<32x32xbf16>, vector<16x32xf32> -> vector<16x32xf32>
    %c0_54 = arith.constant 0 : index
    %c0_55 = arith.constant 0 : index
    %116 = vector.load %arg5[%c0_54, %c0_55] : memref<1x32xf32, #tpu.memory_space<vmem>>, vector<1x32xf32>
    %117 = vector.shape_cast %116 : vector<1x32xf32> to vector<32xf32>
    %118 = vector.shape_cast %117 : vector<32xf32> to vector<1x32xf32>
    %119 = vector.broadcast %118 : vector<1x32xf32> to vector<16x32xf32>
    %120 = arith.addf %115, %119 : vector<16x32xf32>
    %121 = vector.shape_cast %120 : vector<16x32xf32> to vector<2x8x32xf32>
    %c0_56 = arith.constant 0 : index
    %c0_57 = arith.constant 0 : index
    %c0_58 = arith.constant 0 : index
    %122 = vector.load %arg7[%c0_56, %c0_57, %c0_58] : memref<2x8x32xf32, #tpu.memory_space<vmem>>, vector<2x8x32xf32>
    tpu.vector_store %arg7[%c0_56, %c0_57, %c0_58], %121 {strides = array<i32>} : memref<2x8x32xf32, #tpu.memory_space<vmem>>, vector<2x8x32xf32>,
    return
  }
  func.func @transform_0(%arg0: i32) -> (i32, i32, i32) {
    %c0_i32 = arith.constant 0 : i32
    %c0_i32_0 = arith.constant 0 : i32
    %c0_i32_1 = arith.constant 0 : i32
    return %arg0, %c0_i32, %c0_i32_0 : i32, i32, i32
  }
  func.func @transform_1(%arg0: i32) -> (i32, i32) {
    %c0_i32 = arith.constant 0 : i32
    %c0_i32_0 = arith.constant 0 : i32
    %c0_i32_1 = arith.constant 0 : i32
    return %c0_i32, %c0_i32_0 : i32, i32
  }
  func.func @transform_2(%arg0: i32) -> (i32, i32) {
    %c0_i32 = arith.constant 0 : i32
    %c0_i32_0 = arith.constant 0 : i32
    %c0_i32_1 = arith.constant 0 : i32
    return %c0_i32, %c0_i32_0 : i32, i32
  }
  func.func @transform_3(%arg0: i32) -> (i32, i32) {
    %c0_i32 = arith.constant 0 : i32
    %c0_i32_0 = arith.constant 0 : i32
    %c0_i32_1 = arith.constant 0 : i32
    return %c0_i32, %c0_i32_0 : i32, i32
  }
  func.func @transform_4(%arg0: i32) -> (i32, i32) {
    %c0_i32 = arith.constant 0 : i32
    %c0_i32_0 = arith.constant 0 : i32
    %c0_i32_1 = arith.constant 0 : i32
    return %c0_i32, %c0_i32_0 : i32, i32
  }
  func.func @transform_5(%arg0: i32) -> (i32, i32, i32, i32) {
    %c0_i32 = arith.constant 0 : i32
    %c0_i32_0 = arith.constant 0 : i32
    %c0_i32_1 = arith.constant 0 : i32
    %c0_i32_2 = arith.constant 0 : i32
    return %arg0, %c0_i32, %c0_i32_0, %c0_i32_1 : i32, i32, i32, i32
  }
  func.func @transform_6(%arg0: i32) -> (i32, i32, i32) {
    %c0_i32 = arith.constant 0 : i32
    %c0_i32_0 = arith.constant 0 : i32
    %c0_i32_1 = arith.constant 0 : i32
    return %arg0, %c0_i32, %c0_i32_0 : i32, i32, i32
  }
}

</mosaic_0001>

<llo_original>
// kernel: tpu_custom_call.1
$region0: #{tpu_custom_call.1}
  #allocation0 [shape = 'u32[]', space=smem, size = 0x4, offset = 0x4, fixed_abs, tag = 'smem constant byte address 0x4 - core index']
  #allocation1 [shape = 'u32[144,128]{1,0:T(1,128)}', space=vmem, size = 0x12000, scoped, tag = 'internal scratch']
  #allocation2 [shape = 'f32[2,8,32]{2,1,0:T(8,128)}', space=vmem, size = 0x2000, scoped, tag = 'scratch operand']
  %s0 = inlined_call_operand.hbm [shape: f32[2,8,32], index: 0, kind: input, shape index: {}]
  %s1 = inlined_call_operand.hbm [shape: bf16[32,96], index: 1, kind: input, shape index: {}]
  %s2 = inlined_call_operand.vmem [shape: f32[1,96], index: 2, kind: input, shape index: {}]
  %s3 = inlined_call_operand.hbm [shape: bf16[32,32], index: 3, kind: input, shape index: {}]
  %s4 = inlined_call_operand.vmem [shape: f32[1,32], index: 4, kind: input, shape index: {}]
  %s5 = inlined_call_operand.hbm [shape: f32[2,4,8,8], index: 5, kind: output, shape index: {0}]
  %s6 = inlined_call_operand.hbm [shape: f32[2,8,32], index: 6, kind: output, shape index: {1}]
  %7 = xla_tuple %s5, %s6
  %s8 = sld [smem:[#allocation0]]
  $region50: #{tpu_custom_call.1} parent=0
    _
  %s10 = ssub.s32 1, %s8
  %s11 = scalar_select 0, %s10, %s8
  $region1: #{tpu_custom_call.1} parent=0
    #allocation3 [shape = 'u8[8192]{0}', space=vmem, size = 0x2000, scoped, tag = 'input window, operand 0, single buffered']
    #allocation4 [shape = 's32[1]{0}', space=sflag, size = 0x4, scoped, tag = 'scoped memory for tpu_custom_call.1']
    #allocation5 [shape = 's32[1]{0}', space=sflag, size = 0x4, scoped, tag = 'scoped memory for tpu_custom_call.1']
    #allocation6 [shape = 'u8[8192]{0}', space=vmem, size = 0x2000, scoped, tag = 'input window, operand 1, single buffered']
    #allocation7 [shape = 's32[1]{0}', space=sflag, size = 0x4, scoped, tag = 'scoped memory for tpu_custom_call.1']
    #allocation8 [shape = 'u8[8192]{0}', space=vmem, size = 0x2000, scoped, tag = 'input window, operand 3, single buffered']
    #allocation9 [shape = 'u8[32768]{0}', space=vmem, size = 0x8000, scoped, tag = 'output window, operand 0, single buffered']
    #allocation10 [shape = 'u8[8192]{0}', space=vmem, size = 0x2000, scoped, tag = 'output window, operand 1, single buffered']
    #allocation11 [shape = 's32[1]{0}', space=sflag, size = 0x4, scoped, tag = 'scoped memory for tpu_custom_call.1']
    %12 = vsyncpa [#allocation4], 0
    %13 = vsyncpa [#allocation7], 0
    %14 = vsyncpa [#allocation5], 0
    %15 = vsyncpa [#allocation11], 0
    // Predicated region
    $region2: #{tpu_custom_call.1} parent=1 // pred_check
      _
    $region3: #{tpu_custom_call.1} parent=1 // pred_check_branch
      %17 = sbr.rel (0) target = $region5
    $region4: #{tpu_custom_call.1} parent=1 // pred_region
      %s19 = ssub.s32 256, 256
      %20 = vsyncadd [#allocation4], %s19
      %s21 = sshll.u32 [#allocation3], 4
      %s22 = int_to_ptr.vmem [resolvable:$true] %s21
      %27 = dma.hbm_to_vmem [thread:$0]  %s0, 256, %s22, [#allocation4], 128, 128, 8
    $region5: #{tpu_custom_call.1} parent=1 // pred_fallthru
      _
    // Predicated region
    $region6: #{tpu_custom_call.1} parent=1 // pred_check
      _
    $region7: #{tpu_custom_call.1} parent=1 // pred_check_branch
      %29 = sbr.rel (0) target = $region9
    $region8: #{tpu_custom_call.1} parent=1 // pred_region
      %s31 = ssub.s32 256, 256
      %32 = vsyncadd [#allocation7], %s31
      %s33 = sshll.u32 [#allocation6], 4
      %s34 = int_to_ptr.vmem [resolvable:$true] %s33
      %39 = dma.hbm_to_vmem [thread:$0]  %s1, 256, %s34, [#allocation7], 64, 64, 4
    $region9: #{tpu_custom_call.1} parent=1 // pred_fallthru
      _
    // Predicated region
    $region10: #{tpu_custom_call.1} parent=1 // pred_check
      _
    $region11: #{tpu_custom_call.1} parent=1 // pred_check_branch
      %41 = sbr.rel (0) target = $region13
    $region12: #{tpu_custom_call.1} parent=1 // pred_region
      _
    $region13: #{tpu_custom_call.1} parent=1 // pred_fallthru
      _
    // Predicated region
    $region14: #{tpu_custom_call.1} parent=1 // pred_check
      _
    $region15: #{tpu_custom_call.1} parent=1 // pred_check_branch
      %43 = sbr.rel (0) target = $region17
    $region16: #{tpu_custom_call.1} parent=1 // pred_region
      %s45 = ssub.s32 256, 256
      %46 = vsyncadd [#allocation7], %s45
      %s47 = sshll.u32 [#allocation8], 4
      %s48 = int_to_ptr.vmem [resolvable:$true] %s47
      %53 = dma.hbm_to_vmem [thread:$0]  %s3, 256, %s48, [#allocation7], 64, 64, 4
    $region17: #{tpu_custom_call.1} parent=1 // pred_fallthru
      _
    // Predicated region
    $region18: #{tpu_custom_call.1} parent=1 // pred_check
      _
    $region19: #{tpu_custom_call.1} parent=1 // pred_check_branch
      %55 = sbr.rel (0) target = $region21
    $region20: #{tpu_custom_call.1} parent=1 // pred_region
      _
    $region21: #{tpu_custom_call.1} parent=1 // pred_fallthru
      _
    // Predicated region
    $region22: #{tpu_custom_call.1} parent=1 // pred_check
      _
    $region23: #{tpu_custom_call.1} parent=1 // pred_check_branch
      %57 = sbr.rel (0) target = $region25
    $region24: #{tpu_custom_call.1} parent=1 // pred_region
      %58 = dma.done [#allocation4], 256
    $region25: #{tpu_custom_call.1} parent=1 // pred_fallthru
      _
    // Predicated region
    $region26: #{tpu_custom_call.1} parent=1 // pred_check
      _
    $region27: #{tpu_custom_call.1} parent=1 // pred_check_branch
      %60 = sbr.rel (0) target = $region29
    $region28: #{tpu_custom_call.1} parent=1 // pred_region
      %61 = dma.done [#allocation7], 256
    $region29: #{tpu_custom_call.1} parent=1 // pred_fallthru
      _
    // Predicated region
    $region30: #{tpu_custom_call.1} parent=1 // pred_check
      _
    $region31: #{tpu_custom_call.1} parent=1 // pred_check_branch
      %63 = sbr.rel (0) target = $region33
    $region32: #{tpu_custom_call.1} parent=1 // pred_region
      %64 = dma.done [#allocation7], 256
    $region33: #{tpu_custom_call.1} parent=1 // pred_fallthru
      _
    %v66 = vld [vmem:[#allocation3] sm:$0xff]
    %v67 = vld [vmem:[#allocation3 + $0x8] sm:$0xff]
    %v68 = vpack.c.bf16 %v67, %v66
    %v69 = vld [vmem:[#allocation6] sm:$0xf]
    %v70 = vld [vmem:[#allocation6 + $0x4] sm:$0xf]
    %v71 = vld [vmem:[#allocation6 + $0x8] sm:$0xf]
    %v72 = vld [vmem:[#allocation6 + $0xc] sm:$0xf]
    %v73 = vld [vmem:[%s2] sm:$0x1]
    %v75 = vlaneseq
    %v76 = vshrl.u32 %v75, 7
    %v77 = vsub.s32 0, %v76
    %v78 = vrot.slane %v73, %v77
    %v84 = vunpack.c.l.b16 %v69
    %v85 = vunpack.c.l.b16 %v70
    %v86 = vunpack.c.l.b16 %v71
    %v87 = vunpack.c.l.b16 %v72
    %v88 = vpack.c.b16 %v85, %v84
    %v89 = vpack.c.b16 %v87, %v86
    %vm92 = vcmask 261120
    %v94 = vsel %vm92, %v68, 0
    %96 = vmatprep.subr.bf16.mxu0 0
    %97 = vmatpush1.bf16.msra.mxu0 0
    %98 = vmatprep.subr.bf16.mxu0 0
    %99 = vmatpush1.bf16.msra.mxu0 0
    %100 = vmatprep.subr.bf16.mxu0 0
    %101 = vmatpush1.bf16.msra.mxu0 0
    %102 = vmatprep.subr.bf16.mxu0 0
    %103 = vmatpush1.bf16.msra.mxu0 0
    %104 = vmatprep.subr.bf16.mxu0 0
    %105 = vmatpush1.bf16.msra.mxu0 0
    %106 = vmatprep.subr.bf16.mxu0 0
    %107 = vmatpush1.bf16.msra.mxu0 0
    %108 = vmatprep.subr.bf16.mxu0 0
    %109 = vmatpush1.bf16.msra.mxu0 %v89
    %110 = vmatprep.subr.bf16.mxu0 0
    %111 = vmatpush1.bf16.msra.mxu0 %v88
    %112 = vmatprep.subr.bf16.mxu0 0
    %113 = vmatpush2.bf16.msra.mxu0 0
    %114 = vmatprep.subr.bf16.mxu0 0
    %115 = vmatpush2.bf16.msra.mxu0 0
    %116 = vmatprep.subr.bf16.mxu0 0
    %117 = vmatpush2.bf16.msra.mxu0 0
    %118 = vmatprep.subr.bf16.mxu0 0
    %119 = vmatpush2.bf16.msra.mxu0 0
    %120 = vmatprep.subr.bf16.mxu0 0
    %121 = vmatpush2.bf16.msra.mxu0 0
    %122 = vmatprep.subr.bf16.mxu0 0
    %123 = vmatpush2.bf16.msra.mxu0 0
    %124 = vmatprep.subr.bf16.mxu0 0
    %125 = vmatpush2.bf16.msra.mxu0 0
    %126 = vmatprep.subr.bf16.mxu0 0
    %127 = vmatpush2.bf16.msra.mxu0 0
    %128 = vmatprep.mubr.bf16.mxu0 0
    %129 = vmatmul.mubr.bf16.gmra.mxu0 %v94
    %v130 = vpop.f32.mrf.mxu0
    %v131 = vadd.f32 %v78, %v130
    %v132 = vpop.f32.mrf.mxu0
    %v133 = vpop.f32.mrf.mxu0
    %v134 = vadd.f32 %v78, %v133
    %v135 = vpop.f32.mrf.mxu0
    %136 = vdwg.mxu0
    %v137 = vmul.f32 %v131, 0.35355338
    %v138 = vmul.f32 %v134, 0.35355338
    %v139 = vpack.c.bf16 %v137, %v137
    %v140 = vpack.c.bf16 %v138, %v138
    %v141 = vpack.c.bf16 %v131, %v131
    %v142 = vpack.c.bf16 %v134, %v134
    %144 = vrot.lane.b32.xlu0 %v141, 96
    %v145 = vpop.permute.xlu0 %144
    %vm146 = vcmask 64512
    %v148 = vsel %vm146, %v139, 0
    %v151 = vsel %vm146, %v145, 0
    %153 = vmatprep.subr.bf16.mxu0 0
    %154 = vmatpush1.bf16.xpose.msra.mxu0 0
    %155 = vmatprep.subr.bf16.mxu0 0
    %156 = vmatpush1.bf16.xpose.msra.mxu0 0
    %157 = vmatprep.subr.bf16.mxu0 0
    %158 = vmatpush1.bf16.xpose.msra.mxu0 0
    %159 = vmatprep.subr.bf16.mxu0 0
    %160 = vmatpush1.bf16.xpose.msra.mxu0 0
    %161 = vmatprep.subr.bf16.mxu0 0
    %162 = vmatpush1.bf16.xpose.msra.mxu0 0
    %163 = vmatprep.subr.bf16.mxu0 0
    %164 = vmatpush1.bf16.xpose.msra.mxu0 0
    %165 = vmatprep.subr.bf16.mxu0 0
    %166 = vmatpush1.bf16.xpose.msra.mxu0 0
    %167 = vmatprep.subr.bf16.mxu0 0
    %168 = vmatpush1.bf16.xpose.msra.mxu0 %v151
    %169 = vmatprep.subr.bf16.mxu0 0
    %170 = vmatpush2.bf16.xpose.msra.mxu0 0
    %171 = vmatprep.subr.bf16.mxu0 0
    %172 = vmatpush2.bf16.xpose.msra.mxu0 0
    %173 = vmatprep.subr.bf16.mxu0 0
    %174 = vmatpush2.bf16.xpose.msra.mxu0 0
    %175 = vmatprep.subr.bf16.mxu0 0
    %176 = vmatpush2.bf16.xpose.msra.mxu0 0
    %177 = vmatprep.subr.bf16.mxu0 0
    %178 = vmatpush2.bf16.xpose.msra.mxu0 0
    %179 = vmatprep.subr.bf16.mxu0 0
    %180 = vmatpush2.bf16.xpose.msra.mxu0 0
    %181 = vmatprep.subr.bf16.mxu0 0
    %182 = vmatpush2.bf16.xpose.msra.mxu0 0
    %183 = vmatprep.subr.bf16.mxu0 0
    %184 = vmatpush2.bf16.xpose.msra.mxu0 0
    %185 = vmatprep.mubr.bf16.mxu0 0
    %186 = vmatmul.mubr.bf16.gmra.mxu0 %v148
    %v187 = vpop.f32.mrf.mxu0
    %v188 = vadd.f32 0.0, %v187
    %v189 = vpop.f32.mrf.mxu0
    %v190 = vpop.f32.mrf.mxu0
    %v191 = vpop.f32.mrf.mxu0
    %192 = vdwg.mxu0
    %194 = vrot.lane.b32.xlu0 %v142, 96
    %v195 = vpop.permute.xlu0 %194
    %v197 = vsel %vm146, %v140, 0
    %v200 = vsel %vm146, %v195, 0
    %202 = vmatprep.subr.bf16.mxu0 0
    %203 = vmatpush1.bf16.xpose.msra.mxu0 0
    %204 = vmatprep.subr.bf16.mxu0 0
    %205 = vmatpush1.bf16.xpose.msra.mxu0 0
    %206 = vmatprep.subr.bf16.mxu0 0
    %207 = vmatpush1.bf16.xpose.msra.mxu0 0
    %208 = vmatprep.subr.bf16.mxu0 0
    %209 = vmatpush1.bf16.xpose.msra.mxu0 0
    %210 = vmatprep.subr.bf16.mxu0 0
    %211 = vmatpush1.bf16.xpose.msra.mxu0 0
    %212 = vmatprep.subr.bf16.mxu0 0
    %213 = vmatpush1.bf16.xpose.msra.mxu0 0
    %214 = vmatprep.subr.bf16.mxu0 0
    %215 = vmatpush1.bf16.xpose.msra.mxu0 0
    %216 = vmatprep.subr.bf16.mxu0 0
    %217 = vmatpush1.bf16.xpose.msra.mxu0 %v200
    %218 = vmatprep.subr.bf16.mxu0 0
    %219 = vmatpush2.bf16.xpose.msra.mxu0 0
    %220 = vmatprep.subr.bf16.mxu0 0
    %221 = vmatpush2.bf16.xpose.msra.mxu0 0
    %222 = vmatprep.subr.bf16.mxu0 0
    %223 = vmatpush2.bf16.xpose.msra.mxu0 0
    %224 = vmatprep.subr.bf16.mxu0 0
    %225 = vmatpush2.bf16.xpose.msra.mxu0 0
    %226 = vmatprep.subr.bf16.mxu0 0
    %227 = vmatpush2.bf16.xpose.msra.mxu0 0
    %228 = vmatprep.subr.bf16.mxu0 0
    %229 = vmatpush2.bf16.xpose.msra.mxu0 0
    %230 = vmatprep.subr.bf16.mxu0 0
    %231 = vmatpush2.bf16.xpose.msra.mxu0 0
    %232 = vmatprep.subr.bf16.mxu0 0
    %233 = vmatpush2.bf16.xpose.msra.mxu0 0
    %234 = vmatprep.mubr.bf16.mxu0 0
    %235 = vmatmul.mubr.bf16.gmra.mxu0 %v197
    %v236 = vpop.f32.mrf.mxu0
    %v237 = vadd.f32 0.0, %v236
    %v238 = vpop.f32.mrf.mxu0
    %v239 = vpop.f32.mrf.mxu0
    %v240 = vpop.f32.mrf.mxu0
    %241 = vdwg.mxu0
    %v242 = vsel %vm146, %v188, -inf
    %243 = vmax.xlane.f32.xlu0 %v242
    %v244 = vpop.xlane.xlu0 %243
    %v245 = vsel %vm146, %v237, -inf
    %246 = vmax.xlane.f32.xlu0 %v245
    %v247 = vpop.xlane.xlu0 %246
    %v248 = vsub.f32 %v188, %v244
    %v249 = vsub.f32 %v237, %v247
    %v250 = vmul.f32 %v248, 1.442695
    %v251 = vpow.pop %v250
    %v252 = vmul.f32 %v249, 1.442695
    %v253 = vpow.pop %v252
    %v254 = vsel %vm146, %v251, 0.0
    %255 = vadd.xlane.f32.xlu0 %v254
    %v256 = vpop.xlane.xlu0 %255
    %v257 = vsel %vm146, %v253, 0.0
    %258 = vadd.xlane.f32.xlu0 %v257
    %v259 = vpop.xlane.xlu0 %258
    %v260 = vrcp.pop %v256
    %v261 = vrcp.pop %v259
    %v262 = vmul.f32 %v251, %v260
    %v263 = vmul.f32 %v253, %v261
    %264 = vst.msk [vmem:[#allocation9] sm:$0xff] %vm146, %v262
    %265 = vst.msk [vmem:[#allocation9 + $0x20] sm:$0xff] %vm146, %v263
    %v266 = vpack.c.bf16 %v262, %v262
    %v267 = vpack.c.bf16 %v263, %v263
    %268 = vrot.lane.b32.xlu0 %v141, 64
    %v269 = vpop.permute.xlu0 %268
    %v271 = vsel %vm146, %v266, 0
    %vm273 = vcmask 1043456
    %v275 = vsel %vm273, %v269, 0
    %277 = vmatprep.subr.bf16.mxu0 0
    %278 = vmatpush1.bf16.msra.mxu0 0
    %279 = vmatprep.subr.bf16.mxu0 0
    %280 = vmatpush1.bf16.msra.mxu0 0
    %281 = vmatprep.subr.bf16.mxu0 0
    %282 = vmatpush1.bf16.msra.mxu0 0
    %283 = vmatprep.subr.bf16.mxu0 0
    %284 = vmatpush1.bf16.msra.mxu0 0
    %285 = vmatprep.subr.bf16.mxu0 0
    %286 = vmatpush1.bf16.msra.mxu0 0
    %287 = vmatprep.subr.bf16.mxu0 0
    %288 = vmatpush1.bf16.msra.mxu0 0
    %289 = vmatprep.subr.bf16.mxu0 0
    %290 = vmatpush1.bf16.msra.mxu0 0
    %291 = vmatprep.subr.bf16.mxu0 0
    %292 = vmatpush1.bf16.msra.mxu0 %v275
    %293 = vmatprep.subr.bf16.mxu0 0
    %294 = vmatpush2.bf16.msra.mxu0 0
    %295 = vmatprep.subr.bf16.mxu0 0
    %296 = vmatpush2.bf16.msra.mxu0 0
    %297 = vmatprep.subr.bf16.mxu0 0
    %298 = vmatpush2.bf16.msra.mxu0 0
    %299 = vmatprep.subr.bf16.mxu0 0
    %300 = vmatpush2.bf16.msra.mxu0 0
    %301 = vmatprep.subr.bf16.mxu0 0
    %302 = vmatpush2.bf16.msra.mxu0 0
    %303 = vmatprep.subr.bf16.mxu0 0
    %304 = vmatpush2.bf16.msra.mxu0 0
    %305 = vmatprep.subr.bf16.mxu0 0
    %306 = vmatpush2.bf16.msra.mxu0 0
    %307 = vmatprep.subr.bf16.mxu0 0
    %308 = vmatpush2.bf16.msra.mxu0 0
    %309 = vmatprep.mubr.bf16.mxu0 0
    %310 = vmatmul.mubr.bf16.gmra.mxu0 %v271
    %v311 = vpop.f32.mrf.mxu0
    %v312 = vadd.f32 0.0, %v311
    %v313 = vpop.f32.mrf.mxu0
    %v314 = vpop.f32.mrf.mxu0
    %v315 = vpop.f32.mrf.mxu0
    %316 = vdwg.mxu0
    %317 = vrot.lane.b32.xlu0 %v142, 64
    %v318 = vpop.permute.xlu0 %317
    %v320 = vsel %vm146, %v267, 0
    %v323 = vsel %vm273, %v318, 0
    %325 = vmatprep.subr.bf16.mxu0 0
    %326 = vmatpush1.bf16.msra.mxu0 0
    %327 = vmatprep.subr.bf16.mxu0 0
    %328 = vmatpush1.bf16.msra.mxu0 0
    %329 = vmatprep.subr.bf16.mxu0 0
    %330 = vmatpush1.bf16.msra.mxu0 0
    %331 = vmatprep.subr.bf16.mxu0 0
    %332 = vmatpush1.bf16.msra.mxu0 0
    %333 = vmatprep.subr.bf16.mxu0 0
    %334 = vmatpush1.bf16.msra.mxu0 0
    %335 = vmatprep.subr.bf16.mxu0 0
    %336 = vmatpush1.bf16.msra.mxu0 0
    %337 = vmatprep.subr.bf16.mxu0 0
    %338 = vmatpush1.bf16.msra.mxu0 0
    %339 = vmatprep.subr.bf16.mxu0 0
    %340 = vmatpush1.bf16.msra.mxu0 %v323
    %341 = vmatprep.subr.bf16.mxu0 0
    %342 = vmatpush2.bf16.msra.mxu0 0
    %343 = vmatprep.subr.bf16.mxu0 0
    %344 = vmatpush2.bf16.msra.mxu0 0
    %345 = vmatprep.subr.bf16.mxu0 0
    %346 = vmatpush2.bf16.msra.mxu0 0
    %347 = vmatprep.subr.bf16.mxu0 0
    %348 = vmatpush2.bf16.msra.mxu0 0
    %349 = vmatprep.subr.bf16.mxu0 0
    %350 = vmatpush2.bf16.msra.mxu0 0
    %351 = vmatprep.subr.bf16.mxu0 0
    %352 = vmatpush2.bf16.msra.mxu0 0
    %353 = vmatprep.subr.bf16.mxu0 0
    %354 = vmatpush2.bf16.msra.mxu0 0
    %355 = vmatprep.subr.bf16.mxu0 0
    %356 = vmatpush2.bf16.msra.mxu0 0
    %357 = vmatprep.mubr.bf16.mxu0 0
    %358 = vmatmul.mubr.bf16.gmra.mxu0 %v320
    %v359 = vpop.f32.mrf.mxu0
    %v360 = vadd.f32 0.0, %v359
    %v361 = vpop.f32.mrf.mxu0
    %v362 = vpop.f32.mrf.mxu0
    %v363 = vpop.f32.mrf.mxu0
    %364 = vdwg.mxu0
    %365 = vst.msk [vmem:[#allocation2] sm:$0xff] %vm146, %v312
    %366 = vst.msk [vmem:[#allocation2 + $0x8] sm:$0xff] %vm146, %v360
    %368 = vrot.lane.b32.xlu0 %v139, 120
    %v369 = vpop.permute.xlu0 %368
    %370 = vrot.lane.b32.xlu0 %v141, 88
    %v371 = vpop.permute.xlu0 %370
    %v373 = vsel %vm146, %v369, 0
    %v376 = vsel %vm146, %v371, 0
    %378 = vmatprep.subr.bf16.mxu0 0
    %379 = vmatpush1.bf16.xpose.msra.mxu0 0
    %380 = vmatprep.subr.bf16.mxu0 0
    %381 = vmatpush1.bf16.xpose.msra.mxu0 0
    %382 = vmatprep.subr.bf16.mxu0 0
    %383 = vmatpush1.bf16.xpose.msra.mxu0 0
    %384 = vmatprep.subr.bf16.mxu0 0
    %385 = vmatpush1.bf16.xpose.msra.mxu0 0
    %386 = vmatprep.subr.bf16.mxu0 0
    %387 = vmatpush1.bf16.xpose.msra.mxu0 0
    %388 = vmatprep.subr.bf16.mxu0 0
    %389 = vmatpush1.bf16.xpose.msra.mxu0 0
    %390 = vmatprep.subr.bf16.mxu0 0
    %391 = vmatpush1.bf16.xpose.msra.mxu0 0
    %392 = vmatprep.subr.bf16.mxu0 0
    %393 = vmatpush1.bf16.xpose.msra.mxu0 %v376
    %394 = vmatprep.subr.bf16.mxu0 0
    %395 = vmatpush2.bf16.xpose.msra.mxu0 0
    %396 = vmatprep.subr.bf16.mxu0 0
    %397 = vmatpush2.bf16.xpose.msra.mxu0 0
    %398 = vmatprep.subr.bf16.mxu0 0
    %399 = vmatpush2.bf16.xpose.msra.mxu0 0
    %400 = vmatprep.subr.bf16.mxu0 0
    %401 = vmatpush2.bf16.xpose.msra.mxu0 0
    %402 = vmatprep.subr.bf16.mxu0 0
    %403 = vmatpush2.bf16.xpose.msra.mxu0 0
    %404 = vmatprep.subr.bf16.mxu0 0
    %405 = vmatpush2.bf16.xpose.msra.mxu0 0
    %406 = vmatprep.subr.bf16.mxu0 0
    %407 = vmatpush2.bf16.xpose.msra.mxu0 0
    %408 = vmatprep.subr.bf16.mxu0 0
    %409 = vmatpush2.bf16.xpose.msra.mxu0 0
    %410 = vmatprep.mubr.bf16.mxu0 0
    %411 = vmatmul.mubr.bf16.gmra.mxu0 %v373
    %v412 = vpop.f32.mrf.mxu0
    %v413 = vadd.f32 0.0, %v412
    %v414 = vpop.f32.mrf.mxu0
    %v415 = vpop.f32.mrf.mxu0
    %v416 = vpop.f32.mrf.mxu0
    %417 = vdwg.mxu0
    %419 = vrot.lane.b32.xlu0 %v140, 120
    %v420 = vpop.permute.xlu0 %419
    %421 = vrot.lane.b32.xlu0 %v142, 88
    %v422 = vpop.permute.xlu0 %421
    %v424 = vsel %vm146, %v420, 0
    %v427 = vsel %vm146, %v422, 0
    %429 = vmatprep.subr.bf16.mxu0 0
    %430 = vmatpush1.bf16.xpose.msra.mxu0 0
    %431 = vmatprep.subr.bf16.mxu0 0
    %432 = vmatpush1.bf16.xpose.msra.mxu0 0
    %433 = vmatprep.subr.bf16.mxu0 0
    %434 = vmatpush1.bf16.xpose.msra.mxu0 0
    %435 = vmatprep.subr.bf16.mxu0 0
    %436 = vmatpush1.bf16.xpose.msra.mxu0 0
    %437 = vmatprep.subr.bf16.mxu0 0
    %438 = vmatpush1.bf16.xpose.msra.mxu0 0
    %439 = vmatprep.subr.bf16.mxu0 0
    %440 = vmatpush1.bf16.xpose.msra.mxu0 0
    %441 = vmatprep.subr.bf16.mxu0 0
    %442 = vmatpush1.bf16.xpose.msra.mxu0 0
    %443 = vmatprep.subr.bf16.mxu0 0
    %444 = vmatpush1.bf16.xpose.msra.mxu0 %v427
    %445 = vmatprep.subr.bf16.mxu0 0
    %446 = vmatpush2.bf16.xpose.msra.mxu0 0
    %447 = vmatprep.subr.bf16.mxu0 0
    %448 = vmatpush2.bf16.xpose.msra.mxu0 0
    %449 = vmatprep.subr.bf16.mxu0 0
    %450 = vmatpush2.bf16.xpose.msra.mxu0 0
    %451 = vmatprep.subr.bf16.mxu0 0
    %452 = vmatpush2.bf16.xpose.msra.mxu0 0
    %453 = vmatprep.subr.bf16.mxu0 0
    %454 = vmatpush2.bf16.xpose.msra.mxu0 0
    %455 = vmatprep.subr.bf16.mxu0 0
    %456 = vmatpush2.bf16.xpose.msra.mxu0 0
    %457 = vmatprep.subr.bf16.mxu0 0
    %458 = vmatpush2.bf16.xpose.msra.mxu0 0
    %459 = vmatprep.subr.bf16.mxu0 0
    %460 = vmatpush2.bf16.xpose.msra.mxu0 0
    %461 = vmatprep.mubr.bf16.mxu0 0
    %462 = vmatmul.mubr.bf16.gmra.mxu0 %v424
    %v463 = vpop.f32.mrf.mxu0
    %v464 = vadd.f32 0.0, %v463
    %v465 = vpop.f32.mrf.mxu0
    %v466 = vpop.f32.mrf.mxu0
    %v467 = vpop.f32.mrf.mxu0
    %468 = vdwg.mxu0
    %v469 = vsel %vm146, %v413, -inf
    %470 = vmax.xlane.f32.xlu0 %v469
    %v471 = vpop.xlane.xlu0 %470
    %v472 = vsel %vm146, %v464, -inf
    %473 = vmax.xlane.f32.xlu0 %v472
    %v474 = vpop.xlane.xlu0 %473
    %v475 = vsub.f32 %v413, %v471
    %v476 = vsub.f32 %v464, %v474
    %v477 = vmul.f32 %v475, 1.442695
    %v478 = vpow.pop %v477
    %v479 = vmul.f32 %v476, 1.442695
    %v480 = vpow.pop %v479
    %v481 = vsel %vm146, %v478, 0.0
    %482 = vadd.xlane.f32.xlu0 %v481
    %v483 = vpop.xlane.xlu0 %482
    %v484 = vsel %vm146, %v480, 0.0
    %485 = vadd.xlane.f32.xlu0 %v484
    %v486 = vpop.xlane.xlu0 %485
    %v487 = vrcp.pop %v483
    %v488 = vrcp.pop %v486
    %v489 = vmul.f32 %v478, %v487
    %v490 = vmul.f32 %v480, %v488
    %s491 = scalar_lea.vmem [#allocation9], 8
    %492 = vst.msk [vmem:[%s491] sm:$0xff] %vm146, %v489
    %493 = vst.msk [vmem:[%s491 + $0x20] sm:$0xff] %vm146, %v490
    %v494 = vpack.c.bf16 %v489, %v489
    %v495 = vpack.c.bf16 %v490, %v490
    %496 = vrot.lane.b32.xlu0 %v141, 56
    %v497 = vpop.permute.xlu0 %496
    %v499 = vsel %vm146, %v494, 0
    %v502 = vsel %vm273, %v497, 0
    %504 = vmatprep.subr.bf16.mxu0 0
    %505 = vmatpush1.bf16.msra.mxu0 0
    %506 = vmatprep.subr.bf16.mxu0 0
    %507 = vmatpush1.bf16.msra.mxu0 0
    %508 = vmatprep.subr.bf16.mxu0 0
    %509 = vmatpush1.bf16.msra.mxu0 0
    %510 = vmatprep.subr.bf16.mxu0 0
    %511 = vmatpush1.bf16.msra.mxu0 0
    %512 = vmatprep.subr.bf16.mxu0 0
    %513 = vmatpush1.bf16.msra.mxu0 0
    %514 = vmatprep.subr.bf16.mxu0 0
    %515 = vmatpush1.bf16.msra.mxu0 0
    %516 = vmatprep.subr.bf16.mxu0 0
    %517 = vmatpush1.bf16.msra.mxu0 0
    %518 = vmatprep.subr.bf16.mxu0 0
    %519 = vmatpush1.bf16.msra.mxu0 %v502
    %520 = vmatprep.subr.bf16.mxu0 0
    %521 = vmatpush2.bf16.msra.mxu0 0
    %522 = vmatprep.subr.bf16.mxu0 0
    %523 = vmatpush2.bf16.msra.mxu0 0
    %524 = vmatprep.subr.bf16.mxu0 0
    %525 = vmatpush2.bf16.msra.mxu0 0
    %526 = vmatprep.subr.bf16.mxu0 0
    %527 = vmatpush2.bf16.msra.mxu0 0
    %528 = vmatprep.subr.bf16.mxu0 0
    %529 = vmatpush2.bf16.msra.mxu0 0
    %530 = vmatprep.subr.bf16.mxu0 0
    %531 = vmatpush2.bf16.msra.mxu0 0
    %532 = vmatprep.subr.bf16.mxu0 0
    %533 = vmatpush2.bf16.msra.mxu0 0
    %534 = vmatprep.subr.bf16.mxu0 0
    %535 = vmatpush2.bf16.msra.mxu0 0
    %536 = vmatprep.mubr.bf16.mxu0 0
    %537 = vmatmul.mubr.bf16.gmra.mxu0 %v499
    %v538 = vpop.f32.mrf.mxu0
    %v539 = vadd.f32 0.0, %v538
    %v540 = vpop.f32.mrf.mxu0
    %v541 = vpop.f32.mrf.mxu0
    %v542 = vpop.f32.mrf.mxu0
    %543 = vdwg.mxu0
    %544 = vrot.lane.b32.xlu0 %v142, 56
    %v545 = vpop.permute.xlu0 %544
    %v547 = vsel %vm146, %v495, 0
    %v550 = vsel %vm273, %v545, 0
    %552 = vmatprep.subr.bf16.mxu0 0
    %553 = vmatpush1.bf16.msra.mxu0 0
    %554 = vmatprep.subr.bf16.mxu0 0
    %555 = vmatpush1.bf16.msra.mxu0 0
    %556 = vmatprep.subr.bf16.mxu0 0
    %557 = vmatpush1.bf16.msra.mxu0 0
    %558 = vmatprep.subr.bf16.mxu0 0
    %559 = vmatpush1.bf16.msra.mxu0 0
    %560 = vmatprep.subr.bf16.mxu0 0
    %561 = vmatpush1.bf16.msra.mxu0 0
    %562 = vmatprep.subr.bf16.mxu0 0
    %563 = vmatpush1.bf16.msra.mxu0 0
    %564 = vmatprep.subr.bf16.mxu0 0
    %565 = vmatpush1.bf16.msra.mxu0 0
    %566 = vmatprep.subr.bf16.mxu0 0
    %567 = vmatpush1.bf16.msra.mxu0 %v550
    %568 = vmatprep.subr.bf16.mxu0 0
    %569 = vmatpush2.bf16.msra.mxu0 0
    %570 = vmatprep.subr.bf16.mxu0 0
    %571 = vmatpush2.bf16.msra.mxu0 0
    %572 = vmatprep.subr.bf16.mxu0 0
    %573 = vmatpush2.bf16.msra.mxu0 0
    %574 = vmatprep.subr.bf16.mxu0 0
    %575 = vmatpush2.bf16.msra.mxu0 0
    %576 = vmatprep.subr.bf16.mxu0 0
    %577 = vmatpush2.bf16.msra.mxu0 0
    %578 = vmatprep.subr.bf16.mxu0 0
    %579 = vmatpush2.bf16.msra.mxu0 0
    %580 = vmatprep.subr.bf16.mxu0 0
    %581 = vmatpush2.bf16.msra.mxu0 0
    %582 = vmatprep.subr.bf16.mxu0 0
    %583 = vmatpush2.bf16.msra.mxu0 0
    %584 = vmatprep.mubr.bf16.mxu0 0
    %585 = vmatmul.mubr.bf16.gmra.mxu0 %v547
    %v586 = vpop.f32.mrf.mxu0
    %v587 = vadd.f32 0.0, %v586
    %v588 = vpop.f32.mrf.mxu0
    %v589 = vpop.f32.mrf.mxu0
    %v590 = vpop.f32.mrf.mxu0
    %591 = vdwg.mxu0
    %594 = vrot.lane.b32.xlu0 %v539, 8
    %v595 = vpop.permute.xlu0 %594
    %596 = vrot.lane.b32.xlu0 %v587, 8
    %v597 = vpop.permute.xlu0 %596
    %vm600 = vcmask 130112
    %601 = vst.msk [vmem:[#allocation2] sm:$0xff] %vm600, %v595
    %602 = vst.msk [vmem:[#allocation2 + $0x8] sm:$0xff] %vm600, %v597
    %603 = vrot.lane.b32.xlu0 %v139, 112
    %v604 = vpop.permute.xlu0 %603
    %605 = vrot.lane.b32.xlu0 %v141, 80
    %v606 = vpop.permute.xlu0 %605
    %v608 = vsel %vm146, %v604, 0
    %v611 = vsel %vm146, %v606, 0
    %613 = vmatprep.subr.bf16.mxu0 0
    %614 = vmatpush1.bf16.xpose.msra.mxu0 0
    %615 = vmatprep.subr.bf16.mxu0 0
    %616 = vmatpush1.bf16.xpose.msra.mxu0 0
    %617 = vmatprep.subr.bf16.mxu0 0
    %618 = vmatpush1.bf16.xpose.msra.mxu0 0
    %619 = vmatprep.subr.bf16.mxu0 0
    %620 = vmatpush1.bf16.xpose.msra.mxu0 0
    %621 = vmatprep.subr.bf16.mxu0 0
    %622 = vmatpush1.bf16.xpose.msra.mxu0 0
    %623 = vmatprep.subr.bf16.mxu0 0
    %624 = vmatpush1.bf16.xpose.msra.mxu0 0
    %625 = vmatprep.subr.bf16.mxu0 0
    %626 = vmatpush1.bf16.xpose.msra.mxu0 0
    %627 = vmatprep.subr.bf16.mxu0 0
    %628 = vmatpush1.bf16.xpose.msra.mxu0 %v611
    %629 = vmatprep.subr.bf16.mxu0 0
    %630 = vmatpush2.bf16.xpose.msra.mxu0 0
    %631 = vmatprep.subr.bf16.mxu0 0
    %632 = vmatpush2.bf16.xpose.msra.mxu0 0
    %633 = vmatprep.subr.bf16.mxu0 0
    %634 = vmatpush2.bf16.xpose.msra.mxu0 0
    %635 = vmatprep.subr.bf16.mxu0 0
    %636 = vmatpush2.bf16.xpose.msra.mxu0 0
    %637 = vmatprep.subr.bf16.mxu0 0
    %638 = vmatpush2.bf16.xpose.msra.mxu0 0
    %639 = vmatprep.subr.bf16.mxu0 0
    %640 = vmatpush2.bf16.xpose.msra.mxu0 0
    %641 = vmatprep.subr.bf16.mxu0 0
    %642 = vmatpush2.bf16.xpose.msra.mxu0 0
    %643 = vmatprep.subr.bf16.mxu0 0
    %644 = vmatpush2.bf16.xpose.msra.mxu0 0
    %645 = vmatprep.mubr.bf16.mxu0 0
    %646 = vmatmul.mubr.bf16.gmra.mxu0 %v608
    %v647 = vpop.f32.mrf.mxu0
    %v648 = vadd.f32 0.0, %v647
    %v649 = vpop.f32.mrf.mxu0
    %v650 = vpop.f32.mrf.mxu0
    %v651 = vpop.f32.mrf.mxu0
    %652 = vdwg.mxu0
    %653 = vrot.lane.b32.xlu0 %v140, 112
    %v654 = vpop.permute.xlu0 %653
    %655 = vrot.lane.b32.xlu0 %v142, 80
    %v656 = vpop.permute.xlu0 %655
    %v658 = vsel %vm146, %v654, 0
    %v661 = vsel %vm146, %v656, 0
    %663 = vmatprep.subr.bf16.mxu0 0
    %664 = vmatpush1.bf16.xpose.msra.mxu0 0
    %665 = vmatprep.subr.bf16.mxu0 0
    %666 = vmatpush1.bf16.xpose.msra.mxu0 0
    %667 = vmatprep.subr.bf16.mxu0 0
    %668 = vmatpush1.bf16.xpose.msra.mxu0 0
    %669 = vmatprep.subr.bf16.mxu0 0
    %670 = vmatpush1.bf16.xpose.msra.mxu0 0
    %671 = vmatprep.subr.bf16.mxu0 0
    %672 = vmatpush1.bf16.xpose.msra.mxu0 0
    %673 = vmatprep.subr.bf16.mxu0 0
    %674 = vmatpush1.bf16.xpose.msra.mxu0 0
    %675 = vmatprep.subr.bf16.mxu0 0
    %676 = vmatpush1.bf16.xpose.msra.mxu0 0
    %677 = vmatprep.subr.bf16.mxu0 0
    %678 = vmatpush1.bf16.xpose.msra.mxu0 %v661
    %679 = vmatprep.subr.bf16.mxu0 0
    %680 = vmatpush2.bf16.xpose.msra.mxu0 0
    %681 = vmatprep.subr.bf16.mxu0 0
    %682 = vmatpush2.bf16.xpose.msra.mxu0 0
    %683 = vmatprep.subr.bf16.mxu0 0
    %684 = vmatpush2.bf16.xpose.msra.mxu0 0
    %685 = vmatprep.subr.bf16.mxu0 0
    %686 = vmatpush2.bf16.xpose.msra.mxu0 0
    %687 = vmatprep.subr.bf16.mxu0 0
    %688 = vmatpush2.bf16.xpose.msra.mxu0 0
    %689 = vmatprep.subr.bf16.mxu0 0
    %690 = vmatpush2.bf16.xpose.msra.mxu0 0
    %691 = vmatprep.subr.bf16.mxu0 0
    %692 = vmatpush2.bf16.xpose.msra.mxu0 0
    %693 = vmatprep.subr.bf16.mxu0 0
    %694 = vmatpush2.bf16.xpose.msra.mxu0 0
    %695 = vmatprep.mubr.bf16.mxu0 0
    %696 = vmatmul.mubr.bf16.gmra.mxu0 %v658
    %v697 = vpop.f32.mrf.mxu0
    %v698 = vadd.f32 0.0, %v697
    %v699 = vpop.f32.mrf.mxu0
    %v700 = vpop.f32.mrf.mxu0
    %v701 = vpop.f32.mrf.mxu0
    %702 = vdwg.mxu0
    %v703 = vsel %vm146, %v648, -inf
    %704 = vmax.xlane.f32.xlu0 %v703
    %v705 = vpop.xlane.xlu0 %704
    %v706 = vsel %vm146, %v698, -inf
    %707 = vmax.xlane.f32.xlu0 %v706
    %v708 = vpop.xlane.xlu0 %707
    %v709 = vsub.f32 %v648, %v705
    %v710 = vsub.f32 %v698, %v708
    %v711 = vmul.f32 %v709, 1.442695
    %v712 = vpow.pop %v711
    %v713 = vmul.f32 %v710, 1.442695
    %v714 = vpow.pop %v713
    %v715 = vsel %vm146, %v712, 0.0
    %716 = vadd.xlane.f32.xlu0 %v715
    %v717 = vpop.xlane.xlu0 %716
    %v718 = vsel %vm146, %v714, 0.0
    %719 = vadd.xlane.f32.xlu0 %v718
    %v720 = vpop.xlane.xlu0 %719
    %v721 = vrcp.pop %v717
    %v722 = vrcp.pop %v720
    %v723 = vmul.f32 %v712, %v721
    %v724 = vmul.f32 %v714, %v722
    %s725 = scalar_lea.vmem [#allocation9], 16
    %726 = vst.msk [vmem:[%s725] sm:$0xff] %vm146, %v723
    %727 = vst.msk [vmem:[%s725 + $0x20] sm:$0xff] %vm146, %v724
    %v728 = vpack.c.bf16 %v723, %v723
    %v729 = vpack.c.bf16 %v724, %v724
    %730 = vrot.lane.b32.xlu0 %v141, 48
    %v731 = vpop.permute.xlu0 %730
    %v733 = vsel %vm146, %v728, 0
    %v736 = vsel %vm273, %v731, 0
    %738 = vmatprep.subr.bf16.mxu0 0
    %739 = vmatpush1.bf16.msra.mxu0 0
    %740 = vmatprep.subr.bf16.mxu0 0
    %741 = vmatpush1.bf16.msra.mxu0 0
    %742 = vmatprep.subr.bf16.mxu0 0
    %743 = vmatpush1.bf16.msra.mxu0 0
    %744 = vmatprep.subr.bf16.mxu0 0
    %745 = vmatpush1.bf16.msra.mxu0 0
    %746 = vmatprep.subr.bf16.mxu0 0
    %747 = vmatpush1.bf16.msra.mxu0 0
    %748 = vmatprep.subr.bf16.mxu0 0
    %749 = vmatpush1.bf16.msra.mxu0 0
    %750 = vmatprep.subr.bf16.mxu0 0
    %751 = vmatpush1.bf16.msra.mxu0 0
    %752 = vmatprep.subr.bf16.mxu0 0
    %753 = vmatpush1.bf16.msra.mxu0 %v736
    %754 = vmatprep.subr.bf16.mxu0 0
    %755 = vmatpush2.bf16.msra.mxu0 0
    %756 = vmatprep.subr.bf16.mxu0 0
    %757 = vmatpush2.bf16.msra.mxu0 0
    %758 = vmatprep.subr.bf16.mxu0 0
    %759 = vmatpush2.bf16.msra.mxu0 0
    %760 = vmatprep.subr.bf16.mxu0 0
    %761 = vmatpush2.bf16.msra.mxu0 0
    %762 = vmatprep.subr.bf16.mxu0 0
    %763 = vmatpush2.bf16.msra.mxu0 0
    %764 = vmatprep.subr.bf16.mxu0 0
    %765 = vmatpush2.bf16.msra.mxu0 0
    %766 = vmatprep.subr.bf16.mxu0 0
    %767 = vmatpush2.bf16.msra.mxu0 0
    %768 = vmatprep.subr.bf16.mxu0 0
    %769 = vmatpush2.bf16.msra.mxu0 0
    %770 = vmatprep.mubr.bf16.mxu0 0
    %771 = vmatmul.mubr.bf16.gmra.mxu0 %v733
    %v772 = vpop.f32.mrf.mxu0
    %v773 = vadd.f32 0.0, %v772
    %v774 = vpop.f32.mrf.mxu0
    %v775 = vpop.f32.mrf.mxu0
    %v776 = vpop.f32.mrf.mxu0
    %777 = vdwg.mxu0
    %778 = vrot.lane.b32.xlu0 %v142, 48
    %v779 = vpop.permute.xlu0 %778
    %v781 = vsel %vm146, %v729, 0
    %v784 = vsel %vm273, %v779, 0
    %786 = vmatprep.subr.bf16.mxu0 0
    %787 = vmatpush1.bf16.msra.mxu0 0
    %788 = vmatprep.subr.bf16.mxu0 0
    %789 = vmatpush1.bf16.msra.mxu0 0
    %790 = vmatprep.subr.bf16.mxu0 0
    %791 = vmatpush1.bf16.msra.mxu0 0
    %792 = vmatprep.subr.bf16.mxu0 0
    %793 = vmatpush1.bf16.msra.mxu0 0
    %794 = vmatprep.subr.bf16.mxu0 0
    %795 = vmatpush1.bf16.msra.mxu0 0
    %796 = vmatprep.subr.bf16.mxu0 0
    %797 = vmatpush1.bf16.msra.mxu0 0
    %798 = vmatprep.subr.bf16.mxu0 0
    %799 = vmatpush1.bf16.msra.mxu0 0
    %800 = vmatprep.subr.bf16.mxu0 0
    %801 = vmatpush1.bf16.msra.mxu0 %v784
    %802 = vmatprep.subr.bf16.mxu0 0
    %803 = vmatpush2.bf16.msra.mxu0 0
    %804 = vmatprep.subr.bf16.mxu0 0
    %805 = vmatpush2.bf16.msra.mxu0 0
    %806 = vmatprep.subr.bf16.mxu0 0
    %807 = vmatpush2.bf16.msra.mxu0 0
    %808 = vmatprep.subr.bf16.mxu0 0
    %809 = vmatpush2.bf16.msra.mxu0 0
    %810 = vmatprep.subr.bf16.mxu0 0
    %811 = vmatpush2.bf16.msra.mxu0 0
    %812 = vmatprep.subr.bf16.mxu0 0
    %813 = vmatpush2.bf16.msra.mxu0 0
    %814 = vmatprep.subr.bf16.mxu0 0
    %815 = vmatpush2.bf16.msra.mxu0 0
    %816 = vmatprep.subr.bf16.mxu0 0
    %817 = vmatpush2.bf16.msra.mxu0 0
    %818 = vmatprep.mubr.bf16.mxu0 0
    %819 = vmatmul.mubr.bf16.gmra.mxu0 %v781
    %v820 = vpop.f32.mrf.mxu0
    %v821 = vadd.f32 0.0, %v820
    %v822 = vpop.f32.mrf.mxu0
    %v823 = vpop.f32.mrf.mxu0
    %v824 = vpop.f32.mrf.mxu0
    %825 = vdwg.mxu0
    %828 = vrot.lane.b32.xlu0 %v773, 16
    %v829 = vpop.permute.xlu0 %828
    %830 = vrot.lane.b32.xlu0 %v821, 16
    %v831 = vpop.permute.xlu0 %830
    %vm834 = vcmask 195712
    %835 = vst.msk [vmem:[#allocation2] sm:$0xff] %vm834, %v829
    %836 = vst.msk [vmem:[#allocation2 + $0x8] sm:$0xff] %vm834, %v831
    %837 = vrot.lane.b32.xlu0 %v139, 104
    %v838 = vpop.permute.xlu0 %837
    %839 = vrot.lane.b32.xlu0 %v141, 72
    %v840 = vpop.permute.xlu0 %839
    %v842 = vsel %vm146, %v838, 0
    %v845 = vsel %vm146, %v840, 0
    %847 = vmatprep.subr.bf16.mxu0 0
    %848 = vmatpush1.bf16.xpose.msra.mxu0 0
    %849 = vmatprep.subr.bf16.mxu0 0
    %850 = vmatpush1.bf16.xpose.msra.mxu0 0
    %851 = vmatprep.subr.bf16.mxu0 0
    %852 = vmatpush1.bf16.xpose.msra.mxu0 0
    %853 = vmatprep.subr.bf16.mxu0 0
    %854 = vmatpush1.bf16.xpose.msra.mxu0 0
    %855 = vmatprep.subr.bf16.mxu0 0
    %856 = vmatpush1.bf16.xpose.msra.mxu0 0
    %857 = vmatprep.subr.bf16.mxu0 0
    %858 = vmatpush1.bf16.xpose.msra.mxu0 0
    %859 = vmatprep.subr.bf16.mxu0 0
    %860 = vmatpush1.bf16.xpose.msra.mxu0 0
    %861 = vmatprep.subr.bf16.mxu0 0
    %862 = vmatpush1.bf16.xpose.msra.mxu0 %v845
    %863 = vmatprep.subr.bf16.mxu0 0
    %864 = vmatpush2.bf16.xpose.msra.mxu0 0
    %865 = vmatprep.subr.bf16.mxu0 0
    %866 = vmatpush2.bf16.xpose.msra.mxu0 0
    %867 = vmatprep.subr.bf16.mxu0 0
    %868 = vmatpush2.bf16.xpose.msra.mxu0 0
    %869 = vmatprep.subr.bf16.mxu0 0
    %870 = vmatpush2.bf16.xpose.msra.mxu0 0
    %871 = vmatprep.subr.bf16.mxu0 0
    %872 = vmatpush2.bf16.xpose.msra.mxu0 0
    %873 = vmatprep.subr.bf16.mxu0 0
    %874 = vmatpush2.bf16.xpose.msra.mxu0 0
    %875 = vmatprep.subr.bf16.mxu0 0
    %876 = vmatpush2.bf16.xpose.msra.mxu0 0
    %877 = vmatprep.subr.bf16.mxu0 0
    %878 = vmatpush2.bf16.xpose.msra.mxu0 0
    %879 = vmatprep.mubr.bf16.mxu0 0
    %880 = vmatmul.mubr.bf16.gmra.mxu0 %v842
    %v881 = vpop.f32.mrf.mxu0
    %v882 = vadd.f32 0.0, %v881
    %v883 = vpop.f32.mrf.mxu0
    %v884 = vpop.f32.mrf.mxu0
    %v885 = vpop.f32.mrf.mxu0
    %886 = vdwg.mxu0
    %887 = vrot.lane.b32.xlu0 %v140, 104
    %v888 = vpop.permute.xlu0 %887
    %889 = vrot.lane.b32.xlu0 %v142, 72
    %v890 = vpop.permute.xlu0 %889
    %v892 = vsel %vm146, %v888, 0
    %v895 = vsel %vm146, %v890, 0
    %897 = vmatprep.subr.bf16.mxu0 0
    %898 = vmatpush1.bf16.xpose.msra.mxu0 0
    %899 = vmatprep.subr.bf16.mxu0 0
    %900 = vmatpush1.bf16.xpose.msra.mxu0 0
    %901 = vmatprep.subr.bf16.mxu0 0
    %902 = vmatpush1.bf16.xpose.msra.mxu0 0
    %903 = vmatprep.subr.bf16.mxu0 0
    %904 = vmatpush1.bf16.xpose.msra.mxu0 0
    %905 = vmatprep.subr.bf16.mxu0 0
    %906 = vmatpush1.bf16.xpose.msra.mxu0 0
    %907 = vmatprep.subr.bf16.mxu0 0
    %908 = vmatpush1.bf16.xpose.msra.mxu0 0
    %909 = vmatprep.subr.bf16.mxu0 0
    %910 = vmatpush1.bf16.xpose.msra.mxu0 0
    %911 = vmatprep.subr.bf16.mxu0 0
    %912 = vmatpush1.bf16.xpose.msra.mxu0 %v895
    %913 = vmatprep.subr.bf16.mxu0 0
    %914 = vmatpush2.bf16.xpose.msra.mxu0 0
    %915 = vmatprep.subr.bf16.mxu0 0
    %916 = vmatpush2.bf16.xpose.msra.mxu0 0
    %917 = vmatprep.subr.bf16.mxu0 0
    %918 = vmatpush2.bf16.xpose.msra.mxu0 0
    %919 = vmatprep.subr.bf16.mxu0 0
    %920 = vmatpush2.bf16.xpose.msra.mxu0 0
    %921 = vmatprep.subr.bf16.mxu0 0
    %922 = vmatpush2.bf16.xpose.msra.mxu0 0
    %923 = vmatprep.subr.bf16.mxu0 0
    %924 = vmatpush2.bf16.xpose.msra.mxu0 0
    %925 = vmatprep.subr.bf16.mxu0 0
    %926 = vmatpush2.bf16.xpose.msra.mxu0 0
    %927 = vmatprep.subr.bf16.mxu0 0
    %928 = vmatpush2.bf16.xpose.msra.mxu0 0
    %929 = vmatprep.mubr.bf16.mxu0 0
    %930 = vmatmul.mubr.bf16.gmra.mxu0 %v892
    %v931 = vpop.f32.mrf.mxu0
    %v932 = vadd.f32 0.0, %v931
    %v933 = vpop.f32.mrf.mxu0
    %v934 = vpop.f32.mrf.mxu0
    %v935 = vpop.f32.mrf.mxu0
    %936 = vdwg.mxu0
    %v937 = vsel %vm146, %v882, -inf
    %938 = vmax.xlane.f32.xlu0 %v937
    %v939 = vpop.xlane.xlu0 %938
    %v940 = vsel %vm146, %v932, -inf
    %941 = vmax.xlane.f32.xlu0 %v940
    %v942 = vpop.xlane.xlu0 %941
    %v943 = vsub.f32 %v882, %v939
    %v944 = vsub.f32 %v932, %v942
    %v945 = vmul.f32 %v943, 1.442695
    %v946 = vpow.pop %v945
    %v947 = vmul.f32 %v944, 1.442695
    %v948 = vpow.pop %v947
    %v949 = vsel %vm146, %v946, 0.0
    %950 = vadd.xlane.f32.xlu0 %v949
    %v951 = vpop.xlane.xlu0 %950
    %v952 = vsel %vm146, %v948, 0.0
    %953 = vadd.xlane.f32.xlu0 %v952
    %v954 = vpop.xlane.xlu0 %953
    %v955 = vrcp.pop %v951
    %v956 = vrcp.pop %v954
    %v957 = vmul.f32 %v946, %v955
    %v958 = vmul.f32 %v948, %v956
    %s959 = scalar_lea.vmem [#allocation9], 24
    %960 = vst.msk [vmem:[%s959] sm:$0xff] %vm146, %v957
    %961 = vst.msk [vmem:[%s959 + $0x20] sm:$0xff] %vm146, %v958
    %v962 = vpack.c.bf16 %v957, %v957
    %v963 = vpack.c.bf16 %v958, %v958
    %964 = vrot.lane.b32.xlu0 %v141, 40
    %v965 = vpop.permute.xlu0 %964
    %v967 = vsel %vm146, %v962, 0
    %v970 = vsel %vm273, %v965, 0
    %972 = vmatprep.subr.bf16.mxu0 0
    %973 = vmatpush1.bf16.msra.mxu0 0
    %974 = vmatprep.subr.bf16.mxu0 0
    %975 = vmatpush1.bf16.msra.mxu0 0
    %976 = vmatprep.subr.bf16.mxu0 0
    %977 = vmatpush1.bf16.msra.mxu0 0
    %978 = vmatprep.subr.bf16.mxu0 0
    %979 = vmatpush1.bf16.msra.mxu0 0
    %980 = vmatprep.subr.bf16.mxu0 0
    %981 = vmatpush1.bf16.msra.mxu0 0
    %982 = vmatprep.subr.bf16.mxu0 0
    %983 = vmatpush1.bf16.msra.mxu0 0
    %984 = vmatprep.subr.bf16.mxu0 0
    %985 = vmatpush1.bf16.msra.mxu0 0
    %986 = vmatprep.subr.bf16.mxu0 0
    %987 = vmatpush1.bf16.msra.mxu0 %v970
    %988 = vmatprep.subr.bf16.mxu0 0
    %989 = vmatpush2.bf16.msra.mxu0 0
    %990 = vmatprep.subr.bf16.mxu0 0
    %991 = vmatpush2.bf16.msra.mxu0 0
    %992 = vmatprep.subr.bf16.mxu0 0
    %993 = vmatpush2.bf16.msra.mxu0 0
    %994 = vmatprep.subr.bf16.mxu0 0
    %995 = vmatpush2.bf16.msra.mxu0 0
    %996 = vmatprep.subr.bf16.mxu0 0
    %997 = vmatpush2.bf16.msra.mxu0 0
    %998 = vmatprep.subr.bf16.mxu0 0
    %999 = vmatpush2.bf16.msra.mxu0 0
    %1000 = vmatprep.subr.bf16.mxu0 0
    %1001 = vmatpush2.bf16.msra.mxu0 0
    %1002 = vmatprep.subr.bf16.mxu0 0
    %1003 = vmatpush2.bf16.msra.mxu0 0
    %1004 = vmatprep.mubr.bf16.mxu0 0
    %1005 = vmatmul.mubr.bf16.gmra.mxu0 %v967
    %v1006 = vpop.f32.mrf.mxu0
    %v1007 = vadd.f32 0.0, %v1006
    %v1008 = vpop.f32.mrf.mxu0
    %v1009 = vpop.f32.mrf.mxu0
    %v1010 = vpop.f32.mrf.mxu0
    %1011 = vdwg.mxu0
    %1012 = vrot.lane.b32.xlu0 %v142, 40
    %v1013 = vpop.permute.xlu0 %1012
    %v1015 = vsel %vm146, %v963, 0
    %v1018 = vsel %vm273, %v1013, 0
    %1020 = vmatprep.subr.bf16.mxu0 0
    %1021 = vmatpush1.bf16.msra.mxu0 0
    %1022 = vmatprep.subr.bf16.mxu0 0
    %1023 = vmatpush1.bf16.msra.mxu0 0
    %1024 = vmatprep.subr.bf16.mxu0 0
    %1025 = vmatpush1.bf16.msra.mxu0 0
    %1026 = vmatprep.subr.bf16.mxu0 0
    %1027 = vmatpush1.bf16.msra.mxu0 0
    %1028 = vmatprep.subr.bf16.mxu0 0
    %1029 = vmatpush1.bf16.msra.mxu0 0
    %1030 = vmatprep.subr.bf16.mxu0 0
    %1031 = vmatpush1.bf16.msra.mxu0 0
    %1032 = vmatprep.subr.bf16.mxu0 0
    %1033 = vmatpush1.bf16.msra.mxu0 0
    %1034 = vmatprep.subr.bf16.mxu0 0
    %1035 = vmatpush1.bf16.msra.mxu0 %v1018
    %1036 = vmatprep.subr.bf16.mxu0 0
    %1037 = vmatpush2.bf16.msra.mxu0 0
    %1038 = vmatprep.subr.bf16.mxu0 0
    %1039 = vmatpush2.bf16.msra.mxu0 0
    %1040 = vmatprep.subr.bf16.mxu0 0
    %1041 = vmatpush2.bf16.msra.mxu0 0
    %1042 = vmatprep.subr.bf16.mxu0 0
    %1043 = vmatpush2.bf16.msra.mxu0 0
    %1044 = vmatprep.subr.bf16.mxu0 0
    %1045 = vmatpush2.bf16.msra.mxu0 0
    %1046 = vmatprep.subr.bf16.mxu0 0
    %1047 = vmatpush2.bf16.msra.mxu0 0
    %1048 = vmatprep.subr.bf16.mxu0 0
    %1049 = vmatpush2.bf16.msra.mxu0 0
    %1050 = vmatprep.subr.bf16.mxu0 0
    %1051 = vmatpush2.bf16.msra.mxu0 0
    %1052 = vmatprep.mubr.bf16.mxu0 0
    %1053 = vmatmul.mubr.bf16.gmra.mxu0 %v1015
    %v1054 = vpop.f32.mrf.mxu0
    %v1055 = vadd.f32 0.0, %v1054
    %v1056 = vpop.f32.mrf.mxu0
    %v1057 = vpop.f32.mrf.mxu0
    %v1058 = vpop.f32.mrf.mxu0
    %1059 = vdwg.mxu0
    %1062 = vrot.lane.b32.xlu0 %v1007, 24
    %v1063 = vpop.permute.xlu0 %1062
    %1064 = vrot.lane.b32.xlu0 %v1055, 24
    %v1065 = vpop.permute.xlu0 %1064
    %vm1068 = vcmask 261312
    %1069 = vst.msk [vmem:[#allocation2] sm:$0xff] %vm1068, %v1063
    %1070 = vst.msk [vmem:[#allocation2 + $0x8] sm:$0xff] %vm1068, %v1065
    %v1071 = vld [vmem:[#allocation2] sm:$0xff]
    %v1072 = vld [vmem:[#allocation2 + $0x8] sm:$0xff]
    %v1073 = vpack.c.bf16 %v1072, %v1071
    %v1074 = vld [vmem:[#allocation8] sm:$0xf]
    %v1075 = vld [vmem:[#allocation8 + $0x4] sm:$0xf]
    %v1076 = vld [vmem:[#allocation8 + $0x8] sm:$0xf]
    %v1077 = vld [vmem:[#allocation8 + $0xc] sm:$0xf]
    %v1078 = vld [vmem:[%s4] sm:$0x1]
    %v1080 = vlaneseq
    %v1081 = vshrl.u32 %v1080, 7
    %v1082 = vsub.s32 0, %v1081
    %v1083 = vrot.slane %v1078, %v1082
    %v1089 = vunpack.c.l.b16 %v1074
    %v1090 = vunpack.c.l.b16 %v1075
    %v1091 = vunpack.c.l.b16 %v1076
    %v1092 = vunpack.c.l.b16 %v1077
    %v1093 = vpack.c.b16 %v1090, %v1089
    %v1094 = vpack.c.b16 %v1092, %v1091
    %v1098 = vsel %vm92, %v1073, 0
    %1100 = vmatprep.subr.bf16.mxu0 0
    %1101 = vmatpush1.bf16.msra.mxu0 0
    %1102 = vmatprep.subr.bf16.mxu0 0
    %1103 = vmatpush1.bf16.msra.mxu0 0
    %1104 = vmatprep.subr.bf16.mxu0 0
    %1105 = vmatpush1.bf16.msra.mxu0 0
    %1106 = vmatprep.subr.bf16.mxu0 0
    %1107 = vmatpush1.bf16.msra.mxu0 0
    %1108 = vmatprep.subr.bf16.mxu0 0
    %1109 = vmatpush1.bf16.msra.mxu0 0
    %1110 = vmatprep.subr.bf16.mxu0 0
    %1111 = vmatpush1.bf16.msra.mxu0 0
    %1112 = vmatprep.subr.bf16.mxu0 0
    %1113 = vmatpush1.bf16.msra.mxu0 %v1094
    %1114 = vmatprep.subr.bf16.mxu0 0
    %1115 = vmatpush1.bf16.msra.mxu0 %v1093
    %1116 = vmatprep.subr.bf16.mxu0 0
    %1117 = vmatpush2.bf16.msra.mxu0 0
    %1118 = vmatprep.subr.bf16.mxu0 0
    %1119 = vmatpush2.bf16.msra.mxu0 0
    %1120 = vmatprep.subr.bf16.mxu0 0
    %1121 = vmatpush2.bf16.msra.mxu0 0
    %1122 = vmatprep.subr.bf16.mxu0 0
    %1123 = vmatpush2.bf16.msra.mxu0 0
    %1124 = vmatprep.subr.bf16.mxu0 0
    %1125 = vmatpush2.bf16.msra.mxu0 0
    %1126 = vmatprep.subr.bf16.mxu0 0
    %1127 = vmatpush2.bf16.msra.mxu0 0
    %1128 = vmatprep.subr.bf16.mxu0 0
    %1129 = vmatpush2.bf16.msra.mxu0 0
    %1130 = vmatprep.subr.bf16.mxu0 0
    %1131 = vmatpush2.bf16.msra.mxu0 0
    %1132 = vmatprep.mubr.bf16.mxu0 0
    %1133 = vmatmul.mubr.bf16.gmra.mxu0 %v1098
    %v1134 = vpop.f32.mrf.mxu0
    %v1135 = vadd.f32 %v1083, %v1134
    %v1136 = vpop.f32.mrf.mxu0
    %v1137 = vpop.f32.mrf.mxu0
    %v1138 = vadd.f32 %v1083, %v1137
    %v1139 = vpop.f32.mrf.mxu0
    %1140 = vdwg.mxu0
    %1141 = vst.msk [vmem:[#allocation10] sm:$0xff] %vm92, %v1135
    %1142 = vst.msk [vmem:[#allocation10 + $0x8] sm:$0xff] %vm92, %v1138
    // Predicated region
    $region34: #{tpu_custom_call.1} parent=1 // pred_check
      _
    $region35: #{tpu_custom_call.1} parent=1 // pred_check_branch
      %1144 = sbr.rel (0) target = $region37
    $region36: #{tpu_custom_call.1} parent=1 // pred_region
      %s1146 = ssub.s32 1024, 1024
      %1147 = vsyncadd [#allocation5], %s1146
      %s1148 = sshll.u32 [#allocation9], 4
      %s1149 = int_to_ptr.vmem [resolvable:$true] %s1148
      %1154 = dma.vmem_to_hbm [thread:$0]  %s1149, 1024, %s5, [#allocation5], 128, 128, 8
    $region37: #{tpu_custom_call.1} parent=1 // pred_fallthru
      _
    // Predicated region
    $region38: #{tpu_custom_call.1} parent=1 // pred_check
      _
    $region39: #{tpu_custom_call.1} parent=1 // pred_check_branch
      %1156 = sbr.rel (0) target = $region41
    $region40: #{tpu_custom_call.1} parent=1 // pred_region
      %s1158 = ssub.s32 256, 256
      %1159 = vsyncadd [#allocation11], %s1158
      %s1160 = sshll.u32 [#allocation10], 4
      %s1161 = int_to_ptr.vmem [resolvable:$true] %s1160
      %1166 = dma.vmem_to_hbm [thread:$0]  %s1161, 256, %s6, [#allocation11], 128, 128, 8
    $region41: #{tpu_custom_call.1} parent=1 // pred_fallthru
      _
    // Predicated region
    $region42: #{tpu_custom_call.1} parent=1 // pred_check
      _
    $region43: #{tpu_custom_call.1} parent=1 // pred_check_branch
      %1168 = sbr.rel (0) target = $region45
    $region44: #{tpu_custom_call.1} parent=1 // pred_region
      %1169 = dma.done [#allocation5], 1024
    $region45: #{tpu_custom_call.1} parent=1 // pred_fallthru
      _
    // Predicated region
    $region46: #{tpu_custom_call.1} parent=1 // pred_check
      _
    $region47: #{tpu_custom_call.1} parent=1 // pred_check_branch
      %1171 = sbr.rel (0) target = $region49
    $region48: #{tpu_custom_call.1} parent=1 // pred_region
      %1172 = dma.done [#allocation11], 256
    $region49: #{tpu_custom_call.1} parent=1 // pred_fallthru
      _
    %1173 = vsyncpa [#allocation4], 1
    %1174 = vsyncpa [#allocation7], 1
    %1175 = vsyncpa [#allocation5], 1
    %1176 = vsyncpa [#allocation11], 1

</llo_original>
